<compile_context>
chip_gen: v7x
topology: tpu7x:2x2x1
jax: 0.10.0
libtpu: 0.0.40
codegen_flags: <defaults>
</compile_context>

<pallas_src>
import math
from functools import partial

import jax
import jax.numpy as jnp
from jax import lax
from jax.experimental import pallas as pl
from jax.experimental.pallas import tpu as pltpu

COMPUTE_DTYPE = jnp.bfloat16  # MXU-native operand dtype; accumulation stays f32.


# ----------------------------------------------------------------------------
# Tiling helpers
# ----------------------------------------------------------------------------
def _round_up(x, m):
    return ((x + m - 1) // m) * m


def _pick_tile(dim, target, align):
    """Tile <= target: full dim if it fits; else largest align-multiple divisor;
    else an align-multiple of target (caller pads dim up to a multiple of it)."""
    if dim <= target:
        return dim
    t = (target // align) * align
    while t >= align:
        if dim % t == 0:
            return t
        t -= align
    return (target // align) * align


def _attn_tile(dim, target, align):
    """Like _pick_tile but never requires padding (attention has no masking yet)."""
    if dim <= target:
        return dim
    t = (target // align) * align
    while t >= align:
        if dim % t == 0:
            return t
        t -= align
    # TODO(synk): ragged seq lengths need kv masking; fall back to one block.
    return dim


# ----------------------------------------------------------------------------
# Kernel 1: tiled dense layer  y = x @ W + b  (bf16 operands, f32 MXU accumulation)
# ----------------------------------------------------------------------------
def _linear_kernel(x_ref, w_ref, b_ref, o_ref, acc_ref):
    k = pl.program_id(2)

    @pl.when(k == 0)
    def _():
        acc_ref[...] = jnp.zeros_like(acc_ref)

    acc_ref[...] += jnp.dot(x_ref[...], w_ref[...],
                            preferred_element_type=jnp.float32)

    @pl.when(k == pl.num_programs(2) - 1)
    def _():
        o_ref[...] = (acc_ref[...] + b_ref[...].astype(jnp.float32)).astype(o_ref.dtype)


def pallas_linear(x2d, w, b, *, out_dtype=None, tm=512, tn=512, tk=1024):
    """x2d: (M, K), w: (K, N), b: (N,) -> (M, N).  Operands should be bf16."""
    M, K = x2d.shape
    Kw, N = w.shape
    assert Kw == K
    out_dtype = out_dtype or x2d.dtype

    tm = _pick_tile(M, tm, 8)      # sublane granule
    tn = _pick_tile(N, tn, 128)    # lane granule
    tk = _pick_tile(K, tk, 128)
    Mp, Np, Kp = _round_up(M, tm), _round_up(N, tn), _round_up(K, tk)

    # Keep >= 2 parallel grid programs so v7x's two TensorCores both get work.
    if (Mp // tm) * (Np // tn) == 1 and Mp >= 256:
        tm_half = _pick_tile(Mp, tm // 2, 8)
        if tm_half >= 8 and Mp % tm_half == 0:
            tm = tm_half

    # Zero-padding is correctness-safe: padded K contributes 0, padded M/N rows/cols
    # are sliced off below.
    if (Mp, Kp) != (M, K):
        x2d = jnp.pad(x2d, ((0, Mp - M), (0, Kp - K)))
    if (Kp, Np) != (K, N):
        w = jnp.pad(w, ((0, Kp - K), (0, Np - N)))
    if Np != N:
        b = jnp.pad(b, (0, Np - N))

    grid = (Mp // tm, Np // tn, Kp // tk)
    itemsize = jnp.dtype(x2d.dtype).itemsize
    cost = pl.CostEstimate(
        flops=2 * Mp * Np * Kp,
        transcendentals=0,
        bytes_accessed=(Mp * Kp * (Np // tn) + Kp * Np * (Mp // tm) + Mp * Np) * itemsize,
    )

    out = pl.pallas_call(
        _linear_kernel,
        out_shape=jax.ShapeDtypeStruct((Mp, Np), out_dtype),
        grid_spec=pltpu.PrefetchScalarGridSpec(
            num_scalar_prefetch=0,
            grid=grid,
            in_specs=[
                pl.BlockSpec((tm, tk), lambda i, j, k: (i, k)),
                pl.BlockSpec((tk, tn), lambda i, j, k: (k, j)),
                pl.BlockSpec((1, tn), lambda i, j, k: (0, j)),
            ],
            out_specs=pl.BlockSpec((tm, tn), lambda i, j, k: (i, j)),
            scratch_shapes=[pltpu.VMEM((tm, tn), jnp.float32)],
        ),
        compiler_params=pltpu.CompilerParams(
            dimension_semantics=("parallel", "parallel", "arbitrary")),
        cost_estimate=cost,
    )(x2d, w, b.reshape(1, Np))

    if (Mp, Np) != (M, N):
        out = out[:M, :N]
    return out


# ----------------------------------------------------------------------------
# Kernel 2: flash-style scaled-dot-product attention (online softmax)
#   q/k/v blocks arrive in "token-major" layout (t, H, Dk) straight from the
#   projection output (no HBM transpose); heads are unrolled statically.
#   The 1/sqrt(d_k) scale is pre-folded into the Q projection weights.
#   Output block is lane-dense (tq, H*Dk) so the writeback is unmasked.
# ----------------------------------------------------------------------------
def _flash_kernel(q_ref, k_ref, v_ref, o_ref, m_sc, l_sc, acc_sc):
    kv = pl.program_id(2)
    H = acc_sc.shape[0]

    @pl.when(kv == 0)
    def _():
        m_sc[...] = jnp.full_like(m_sc, -jnp.inf)
        l_sc[...] = jnp.zeros_like(l_sc)
        acc_sc[...] = jnp.zeros_like(acc_sc)

    q = q_ref[...]   # (tq,  H, Dk) bf16
    k = k_ref[...]   # (tkv, H, Dk) bf16
    v = v_ref[...]   # (tkv, H, Dk) bf16

    dn_qk = (((1,), (1,)), ((), ()))   # contract Dk of q_h with Dk of k_h
    dn_pv = (((1,), (0,)), ((), ()))   # contract tkv of p with tkv of v_h

    for h in range(H):                 # static unroll over heads
        q_h = q[:, h, :]               # (tq, Dk)
        k_h = k[:, h, :]               # (tkv, Dk)
        v_h = v[:, h, :]               # (tkv, Dk)

        s = lax.dot_general(q_h, k_h, dn_qk,
                            preferred_element_type=jnp.float32)   # (tq, tkv) f32
        m_prev = m_sc[h]                                           # (tq, 1)
        m_new = jnp.maximum(m_prev, s.max(axis=-1, keepdims=True))
        alpha = jnp.exp(m_prev - m_new)
        p = jnp.exp(s - m_new)                                     # f32
        l_sc[h] = alpha * l_sc[h] + p.sum(axis=-1, keepdims=True)
        acc_sc[h] = alpha * acc_sc[h] + lax.dot_general(
            p.astype(jnp.bfloat16), v_h, dn_pv,
            preferred_element_type=jnp.float32)
        m_sc[h] = m_new

    @pl.when(kv == pl.num_programs(2) - 1)
    def _():
        # Head merge done in-kernel -> one dense (tq, H*Dk) store; exact divide
        # (runs once per q-tile, negligible cost).
        o_ref[...] = jnp.concatenate(
            [(acc_sc[h] / l_sc[h]).astype(o_ref.dtype) for h in range(H)],
            axis=-1)


def _flash_attention_call(inputs, in_specs, *, B, Sq, Skv, H, Dk, tq, tkv, out_dtype):
    D = H * Dk
    grid = (B, Sq // tq, Skv // tkv)
    itemsize = jnp.dtype(out_dtype).itemsize
    nq = Sq // tq
    cost = pl.CostEstimate(
        flops=4 * B * H * Sq * Skv * Dk,
        transcendentals=B * H * Sq * Skv,
        bytes_accessed=itemsize * (B * H * Dk * (Sq + 2 * Skv * nq) + B * Sq * D),
    )
    return pl.pallas_call(
        _flash_kernel,
        out_shape=jax.ShapeDtypeStruct((B, Sq, D), out_dtype),
        grid_spec=pltpu.PrefetchScalarGridSpec(
            num_scalar_prefetch=0,
            grid=grid,
            in_specs=in_specs,
            out_specs=pl.BlockSpec((None, tq, D), lambda b, qi, ki: (b, qi, 0)),
            scratch_shapes=[
                pltpu.VMEM((H, tq, 1), jnp.float32),    # running max m
                pltpu.VMEM((H, tq, 1), jnp.float32),    # running denom l
                pltpu.VMEM((H, tq, Dk), jnp.float32),   # running numerator acc
            ],
        ),
        compiler_params=pltpu.CompilerParams(
            dimension_semantics=("parallel", "parallel", "arbitrary")),
        cost_estimate=cost,
    )(*inputs)


def pallas_flash_attention_fused(qkv, *, tq=128, tkv=256):
    """qkv: (B, S, 3, H, Dk) (free reshape of the fused QKV projection output).
    q/k/v are selected purely via the index_map on axis 2 -> no HBM relayout."""
    B, S, three, H, Dk = qkv.shape
    assert three == 3
    tq = _attn_tile(S, tq, 8)
    tkv = _attn_tile(S, tkv, 128)
    q_spec = pl.BlockSpec((None, tq, None, H, Dk), lambda b, qi, ki: (b, qi, 0, 0, 0))
    k_spec = pl.BlockSpec((None, tkv, None, H, Dk), lambda b, qi, ki: (b, ki, 1, 0, 0))
    v_spec = pl.BlockSpec((None, tkv, None, H, Dk), lambda b, qi, ki: (b, ki, 2, 0, 0))
    return _flash_attention_call(
        (qkv, qkv, qkv), [q_spec, k_spec, v_spec],
        B=B, Sq=S, Skv=S, H=H, Dk=Dk, tq=tq, tkv=tkv, out_dtype=qkv.dtype)


def pallas_flash_attention(q, k, v, *, tq=128, tkv=256):
    """q: (B, Sq, H, Dk), k/v: (B, Skv, H, Dk) -> (B, Sq, H*Dk)."""
    B, Sq, H, Dk = q.shape
    Skv = k.shape[1]
    tq = _attn_tile(Sq, tq, 8)
    tkv = _attn_tile(Skv, tkv, 128)
    q_spec = pl.BlockSpec((None, tq, H, Dk), lambda b, qi, ki: (b, qi, 0, 0))
    k_spec = pl.BlockSpec((None, tkv, H, Dk), lambda b, qi, ki: (b, ki, 0, 0))
    v_spec = pl.BlockSpec((None, tkv, H, Dk), lambda b, qi, ki: (b, ki, 0, 0))
    return _flash_attention_call(
        (q, k, v), [q_spec, k_spec, v_spec],
        B=B, Sq=Sq, Skv=Skv, H=H, Dk=Dk, tq=tq, tkv=tkv, out_dtype=q.dtype)


# ----------------------------------------------------------------------------
# Parameter preparation (outside jit: QKV fusion, scale fold, bf16 weight cast)
# ----------------------------------------------------------------------------
def prepare_mha_params(params, h, *, fuse_qkv):
    (w_q, b_q), (w_k, b_k), (w_v, b_v), (w_o, b_o) = params
    d_model = w_q.shape[0]
    scale = 1.0 / math.sqrt(d_model // h)
    w_q = w_q * scale                      # fold 1/sqrt(d_k) into the Q projection
    b_q = b_q * scale
    f32 = jnp.float32
    if fuse_qkv:
        return {
            "w_qkv": jnp.concatenate([w_q, w_k, w_v], axis=1).astype(COMPUTE_DTYPE),
            "b_qkv": jnp.concatenate([b_q, b_k, b_v], axis=0).astype(f32),
            "w_o": w_o.astype(COMPUTE_DTYPE), "b_o": b_o.astype(f32),
        }
    return {
        "w_q": w_q.astype(COMPUTE_DTYPE), "b_q": b_q.astype(f32),
        "w_k": w_k.astype(COMPUTE_DTYPE), "b_k": b_k.astype(f32),
        "w_v": w_v.astype(COMPUTE_DTYPE), "b_v": b_v.astype(f32),
        "w_o": w_o.astype(COMPUTE_DTYPE), "b_o": b_o.astype(f32),
    }


# ----------------------------------------------------------------------------
# Multi-head attention forward (mirrors MultiHeadAttention.forward, eval mode)
# ----------------------------------------------------------------------------
@partial(jax.jit, static_argnames=("h",))
def mha_forward_self(prep, x, *, h):
    """Self-attention path with fused QKV projection.  x: (B, S, D) f32."""
    B, S, D = x.shape
    d_k = D // h
    x2 = x.reshape(B * S, D).astype(COMPUTE_DTYPE)
    qkv = pallas_linear(x2, prep["w_qkv"], prep["b_qkv"], out_dtype=COMPUTE_DTYPE)
    qkv5 = qkv.reshape(B, S, 3, h, d_k)               # free reinterpretation
    attn = pallas_flash_attention_fused(qkv5)          # (B, S, D) bf16, lane-dense
    out = pallas_linear(attn.reshape(B * S, D), prep["w_o"], prep["b_o"],
                        out_dtype=jnp.float32)
    return out.reshape(B, S, D)


@partial(jax.jit, static_argnames=("h",))
def mha_forward(prep, q, k, v, *, h):
    """General (cross-attention) path with separate projections."""
    B, Sq, D = q.shape
    d_k = D // h

    def project(x, w, b):
        Bx, Sx, _ = x.shape
        y = pallas_linear(x.reshape(Bx * Sx, D).astype(COMPUTE_DTYPE), w, b,
                          out_dtype=COMPUTE_DTYPE)
        return y.reshape(Bx, Sx, h, d_k)               # free reinterpretation

    _q = project(q, prep["w_q"], prep["b_q"])
    _k = project(k, prep["w_k"], prep["b_k"])
    _v = project(v, prep["w_v"], prep["b_v"])
    attn = pallas_flash_attention(_q, _k, _v)           # (B, Sq, D) bf16
    out = pallas_linear(attn.reshape(B * Sq, D), prep["w_o"], prep["b_o"],
                        out_dtype=jnp.float32)
    return out.reshape(B, Sq, D)


# ----------------------------------------------------------------------------
# Deterministic parameter init + pure-JAX reference + driver
# ----------------------------------------------------------------------------
def init_params(key, d_model):
    params = []
    for _ in range(4):
        kw, kb, key = jax.random.split(key, 3)
        bound = 1.0 / math.sqrt(d_model)
        w = jax.random.uniform(kw, (d_model, d_model), jnp.float32, -bound, bound)
        b = jax.random.uniform(kb, (d_model,), jnp.float32, -bound, bound)
        params.append((w, b))
    return params


def reference_mha(params, q, k, v, h):
    """Pure-JAX f32 reference matching the PyTorch forward (eval mode, mask=None)."""
    B, S, D = q.shape
    d_k = D // h

    def project(x, wb):
        w, b = wb
        y = x @ w + b
        return y.reshape(B, -1, h, d_k).transpose(0, 2, 1, 3)

    _q, _k, _v = (project(x, wb) for x, wb in zip((q, k, v), params[:3]))
    scores = jnp.einsum("bhqd,bhkd->bhqk", _q, _k) / math.sqrt(d_k)
    p = jax.nn.softmax(scores, axis=-1)
    x = jnp.einsum("bhqk,bhkd->bhqd", p, _v)
    x = x.transpose(0, 2, 1, 3).reshape(B, -1, D)
    w_o, b_o = params[3]
    return x @ w_o + b_o


if __name__ == "__main__":
    # --- small shapes consistent with the module ---
    B, S, D, H = 2, 8, 32, 4   # batch, seq, d_model, heads  (d_k = 8)

    key = jax.random.PRNGKey(0)
    kx, kq, kk, kv, kp = jax.random.split(key, 5)
    x = jax.random.normal(kx, (B, S, D), jnp.float32)
    params = init_params(kp, D)

    TOL = dict(atol=2e-2, rtol=2e-2)   # bf16 MXU operands vs f32 reference

    # 1) Self-attention (fused QKV projection path).
    prep_f = prepare_mha_params(params, H, fuse_qkv=True)
    out = jax.block_until_ready(mha_forward_self(prep_f, x, h=H))
    ref = reference_mha(params, x, x, x, H)
    assert out.shape == (B, S, D)
    assert jnp.allclose(out, ref, **TOL), float(jnp.max(jnp.abs(out - ref)))

    # 2) Cross-attention (distinct q/k/v -> separate projections).
    q = jax.random.normal(kq, (B, S, D), jnp.float32)
    k = jax.random.normal(kk, (B, S, D), jnp.float32)
    v = jax.random.normal(kv, (B, S, D), jnp.float32)
    prep_s = prepare_mha_params(params, H, fuse_qkv=False)
    out2 = jax.block_until_ready(mha_forward(prep_s, q, k, v, h=H))
    ref2 = reference_mha(params, q, k, v, H)
    assert jnp.allclose(out2, ref2, **TOL), float(jnp.max(jnp.abs(out2 - ref2)))

    # 3) Larger shape exercising the tiled linear grid and the KV-streamed online softmax.
    B2, S2, D2, H2 = 2, 256, 256, 8
    kx2, kp2 = jax.random.split(jax.random.PRNGKey(1))
    x2 = jax.random.normal(kx2, (B2, S2, D2), jnp.float32)
    params2 = init_params(kp2, D2)
    prep2 = prepare_mha_params(params2, H2, fuse_qkv=True)
    out3 = jax.block_until_ready(mha_forward_self(prep2, x2, h=H2))
    ref3 = reference_mha(params2, x2, x2, x2, H2)
    assert jnp.allclose(out3, ref3, **TOL), float(jnp.max(jnp.abs(out3 - ref3)))

    print("KERNEL_OK")
</pallas_src>

<mosaic_0001>
module attributes {stable_mosaic.version = 11 : i64} {
  func.func @_flash_kernel(%arg0: i32, %arg1: i32, %arg2: i32, %arg3: memref<1x8x1x4x8xbf16, #tpu.memory_space<vmem>>, %arg4: memref<1x8x1x4x8xbf16, #tpu.memory_space<vmem>>, %arg5: memref<1x8x1x4x8xbf16, #tpu.memory_space<vmem>>, %arg6: memref<1x8x32xbf16, #tpu.memory_space<vmem>>, %arg7: memref<4x8x1xf32, #tpu.memory_space<vmem>>, %arg8: memref<4x8x1xf32, #tpu.memory_space<vmem>>, %arg9: memref<4x8x8xf32, #tpu.memory_space<vmem>>) attributes {dimension_semantics = [#tpu.dimension_semantics<parallel>, #tpu.dimension_semantics<parallel>, #tpu.dimension_semantics<arbitrary>], iteration_bounds = array<i64: 2, 1, 1>, scalar_prefetch = 0 : i64, scratch_operands = 3 : i64, tpu.core_type = #tpu.core_type<tc>, window_params = [{transform_indices = @transform_0, window_bounds = array<i64: 1, 8, 1, 4, 8>}, {transform_indices = @transform_1, window_bounds = array<i64: 1, 8, 1, 4, 8>}, {transform_indices = @transform_2, window_bounds = array<i64: 1, 8, 1, 4, 8>}, {transform_indices = @transform_3, window_bounds = array<i64: 1, 8, 32>}]} {
    %c0_i32 = arith.constant 0 : i32
    %0 = arith.cmpi eq, %arg2, %c0_i32 : i32
    %1 = arith.extui %0 : i1 to i32
    %c0_i32_0 = arith.constant 0 : i32
    %2 = arith.cmpi ne, %1, %c0_i32_0 : i32
    scf.if %2 {
      %cst_101 = arith.constant 0xFF800000 : f32
      %168 = vector.broadcast %cst_101 : f32 to vector<4x8x1xf32>
      %c0_102 = arith.constant 0 : index
      %c0_103 = arith.constant 0 : index
      %c0_104 = arith.constant 0 : index
      %169 = vector.load %arg7[%c0_102, %c0_103, %c0_104] : memref<4x8x1xf32, #tpu.memory_space<vmem>>, vector<4x8x1xf32>
      tpu.vector_store %arg7[%c0_102, %c0_103, %c0_104], %168 {strides = array<i32>} : memref<4x8x1xf32, #tpu.memory_space<vmem>>, vector<4x8x1xf32>,
      %cst_105 = arith.constant 0.000000e+00 : f32
      %170 = vector.broadcast %cst_105 : f32 to vector<4x8x1xf32>
      %c0_106 = arith.constant 0 : index
      %c0_107 = arith.constant 0 : index
      %c0_108 = arith.constant 0 : index
      %171 = vector.load %arg8[%c0_106, %c0_107, %c0_108] : memref<4x8x1xf32, #tpu.memory_space<vmem>>, vector<4x8x1xf32>
      tpu.vector_store %arg8[%c0_106, %c0_107, %c0_108], %170 {strides = array<i32>} : memref<4x8x1xf32, #tpu.memory_space<vmem>>, vector<4x8x1xf32>,
      %cst_109 = arith.constant 0.000000e+00 : f32
      %172 = vector.broadcast %cst_109 : f32 to vector<4x8x8xf32>
      %c0_110 = arith.constant 0 : index
      %c0_111 = arith.constant 0 : index
      %c0_112 = arith.constant 0 : index
      %173 = vector.load %arg9[%c0_110, %c0_111, %c0_112] : memref<4x8x8xf32, #tpu.memory_space<vmem>>, vector<4x8x8xf32>
      tpu.vector_store %arg9[%c0_110, %c0_111, %c0_112], %172 {strides = array<i32>} : memref<4x8x8xf32, #tpu.memory_space<vmem>>, vector<4x8x8xf32>,
    } else {
    }
    %c0 = arith.constant 0 : index
    %c0_1 = arith.constant 0 : index
    %c0_2 = arith.constant 0 : index
    %c0_3 = arith.constant 0 : index
    %c0_4 = arith.constant 0 : index
    %3 = vector.load %arg3[%c0, %c0_1, %c0_2, %c0_3, %c0_4] : memref<1x8x1x4x8xbf16, #tpu.memory_space<vmem>>, vector<1x8x1x4x8xbf16>
    %4 = vector.shape_cast %3 : vector<1x8x1x4x8xbf16> to vector<8x4x8xbf16>
    %c0_5 = arith.constant 0 : index
    %c0_6 = arith.constant 0 : index
    %c0_7 = arith.constant 0 : index
    %c0_8 = arith.constant 0 : index
    %c0_9 = arith.constant 0 : index
    %5 = vector.load %arg4[%c0_5, %c0_6, %c0_7, %c0_8, %c0_9] : memref<1x8x1x4x8xbf16, #tpu.memory_space<vmem>>, vector<1x8x1x4x8xbf16>
    %6 = vector.shape_cast %5 : vector<1x8x1x4x8xbf16> to vector<8x4x8xbf16>
    %c0_10 = arith.constant 0 : index
    %c0_11 = arith.constant 0 : index
    %c0_12 = arith.constant 0 : index
    %c0_13 = arith.constant 0 : index
    %c0_14 = arith.constant 0 : index
    %7 = vector.load %arg5[%c0_10, %c0_11, %c0_12, %c0_13, %c0_14] : memref<1x8x1x4x8xbf16, #tpu.memory_space<vmem>>, vector<1x8x1x4x8xbf16>
    %8 = vector.shape_cast %7 : vector<1x8x1x4x8xbf16> to vector<8x4x8xbf16>
    %9 = vector.extract_strided_slice %4 {offsets = [0, 0, 0], sizes = [8, 1, 8], strides = [1, 1, 1]} : vector<8x4x8xbf16> to vector<8x1x8xbf16>
    %10 = vector.shape_cast %9 : vector<8x1x8xbf16> to vector<8x8xbf16>
    %11 = vector.extract_strided_slice %6 {offsets = [0, 0, 0], sizes = [8, 1, 8], strides = [1, 1, 1]} : vector<8x4x8xbf16> to vector<8x1x8xbf16>
    %12 = vector.shape_cast %11 : vector<8x1x8xbf16> to vector<8x8xbf16>
    %13 = vector.extract_strided_slice %8 {offsets = [0, 0, 0], sizes = [8, 1, 8], strides = [1, 1, 1]} : vector<8x4x8xbf16> to vector<8x1x8xbf16>
    %14 = vector.shape_cast %13 : vector<8x1x8xbf16> to vector<8x8xbf16>
    %cst = arith.constant dense<0.000000e+00> : vector<8x8xf32>
    %15 = tpu.matmul %10, %12, %cst {dimension_numbers = #tpu.dot_dimension_numbers<[1], [1], [0], [0], [0, 0, 1, 0], [], []>} : vector<8x8xbf16>, vector<8x8xbf16>, vector<8x8xf32> -> vector<8x8xf32>
    %c0_15 = arith.constant 0 : index
    %c0_16 = arith.constant 0 : index
    %c0_17 = arith.constant 0 : index
    %16 = vector.load %arg7[%c0_15, %c0_16, %c0_17] : memref<4x8x1xf32, #tpu.memory_space<vmem>>, vector<1x8x1xf32>
    %17 = vector.shape_cast %16 : vector<1x8x1xf32> to vector<8x1xf32>
    %cst_18 = arith.constant dense<0xFF800000> : vector<8xf32>
    %18 = vector.multi_reduction <maximumf>, %15, %cst_18 [1] : vector<8x8xf32> to vector<8xf32>
    %19 = vector.shape_cast %18 : vector<8xf32> to vector<8x1xf32>
    %20 = arith.maximumf %17, %19 : vector<8x1xf32>
    %21 = arith.subf %17, %20 : vector<8x1xf32>
    %22 = math.exp %21 : vector<8x1xf32>
    %23 = vector.broadcast %20 : vector<8x1xf32> to vector<8x8xf32>
    %24 = arith.subf %15, %23 : vector<8x8xf32>
    %25 = math.exp %24 : vector<8x8xf32>
    %c0_19 = arith.constant 0 : index
    %c0_20 = arith.constant 0 : index
    %c0_21 = arith.constant 0 : index
    %26 = vector.load %arg8[%c0_19, %c0_20, %c0_21] : memref<4x8x1xf32, #tpu.memory_space<vmem>>, vector<1x8x1xf32>
    %27 = vector.shape_cast %26 : vector<1x8x1xf32> to vector<8x1xf32>
    %28 = arith.mulf %22, %27 : vector<8x1xf32>
    %cst_22 = arith.constant dense<0.000000e+00> : vector<8xf32>
    %29 = vector.multi_reduction <add>, %25, %cst_22 [1] : vector<8x8xf32> to vector<8xf32>
    %30 = vector.shape_cast %29 : vector<8xf32> to vector<8x1xf32>
    %31 = arith.addf %28, %30 : vector<8x1xf32>
    %c0_23 = arith.constant 0 : index
    %c0_24 = arith.constant 0 : index
    %c0_25 = arith.constant 0 : index
    %32 = vector.load %arg8[%c0_23, %c0_24, %c0_25] : memref<4x8x1xf32, #tpu.memory_space<vmem>>, vector<1x8x1xf32>
    %33 = vector.shape_cast %32 : vector<1x8x1xf32> to vector<8x1xf32>
    %34 = vector.shape_cast %31 : vector<8x1xf32> to vector<1x8x1xf32>
    tpu.vector_store %arg8[%c0_23, %c0_24, %c0_25], %34 {strides = array<i32>} : memref<4x8x1xf32, #tpu.memory_space<vmem>>, vector<1x8x1xf32>,
    %c0_26 = arith.constant 0 : index
    %c0_27 = arith.constant 0 : index
    %c0_28 = arith.constant 0 : index
    %35 = vector.load %arg9[%c0_26, %c0_27, %c0_28] : memref<4x8x8xf32, #tpu.memory_space<vmem>>, vector<1x8x8xf32>
    %36 = vector.shape_cast %35 : vector<1x8x8xf32> to vector<8x8xf32>
    %37 = vector.broadcast %22 : vector<8x1xf32> to vector<8x8xf32>
    %38 = arith.mulf %37, %36 : vector<8x8xf32>
    %39 = arith.truncf %25 : vector<8x8xf32> to vector<8x8xbf16>
    %cst_29 = arith.constant dense<0.000000e+00> : vector<8x8xf32>
    %40 = tpu.matmul %39, %14, %cst_29 {dimension_numbers = #tpu.dot_dimension_numbers<[1], [0], [0], [1], [0, 0, 1, 1], [], []>} : vector<8x8xbf16>, vector<8x8xbf16>, vector<8x8xf32> -> vector<8x8xf32>
    %41 = arith.addf %38, %40 : vector<8x8xf32>
    %c0_30 = arith.constant 0 : index
    %c0_31 = arith.constant 0 : index
    %c0_32 = arith.constant 0 : index
    %42 = vector.load %arg9[%c0_30, %c0_31, %c0_32] : memref<4x8x8xf32, #tpu.memory_space<vmem>>, vector<1x8x8xf32>
    %43 = vector.shape_cast %42 : vector<1x8x8xf32> to vector<8x8xf32>
    %44 = vector.shape_cast %41 : vector<8x8xf32> to vector<1x8x8xf32>
    tpu.vector_store %arg9[%c0_30, %c0_31, %c0_32], %44 {strides = array<i32>} : memref<4x8x8xf32, #tpu.memory_space<vmem>>, vector<1x8x8xf32>,
    %c0_33 = arith.constant 0 : index
    %c0_34 = arith.constant 0 : index
    %c0_35 = arith.constant 0 : index
    %45 = vector.load %arg7[%c0_33, %c0_34, %c0_35] : memref<4x8x1xf32, #tpu.memory_space<vmem>>, vector<1x8x1xf32>
    %46 = vector.shape_cast %45 : vector<1x8x1xf32> to vector<8x1xf32>
    %47 = vector.shape_cast %20 : vector<8x1xf32> to vector<1x8x1xf32>
    tpu.vector_store %arg7[%c0_33, %c0_34, %c0_35], %47 {strides = array<i32>} : memref<4x8x1xf32, #tpu.memory_space<vmem>>, vector<1x8x1xf32>,
    %48 = vector.extract_strided_slice %4 {offsets = [0, 1, 0], sizes = [8, 1, 8], strides = [1, 1, 1]} : vector<8x4x8xbf16> to vector<8x1x8xbf16>
    %49 = vector.shape_cast %48 : vector<8x1x8xbf16> to vector<8x8xbf16>
    %50 = vector.extract_strided_slice %6 {offsets = [0, 1, 0], sizes = [8, 1, 8], strides = [1, 1, 1]} : vector<8x4x8xbf16> to vector<8x1x8xbf16>
    %51 = vector.shape_cast %50 : vector<8x1x8xbf16> to vector<8x8xbf16>
    %52 = vector.extract_strided_slice %8 {offsets = [0, 1, 0], sizes = [8, 1, 8], strides = [1, 1, 1]} : vector<8x4x8xbf16> to vector<8x1x8xbf16>
    %53 = vector.shape_cast %52 : vector<8x1x8xbf16> to vector<8x8xbf16>
    %cst_36 = arith.constant dense<0.000000e+00> : vector<8x8xf32>
    %54 = tpu.matmul %49, %51, %cst_36 {dimension_numbers = #tpu.dot_dimension_numbers<[1], [1], [0], [0], [0, 0, 1, 0], [], []>} : vector<8x8xbf16>, vector<8x8xbf16>, vector<8x8xf32> -> vector<8x8xf32>
    %c1 = arith.constant 1 : index
    %c0_37 = arith.constant 0 : index
    %c0_38 = arith.constant 0 : index
    %55 = vector.load %arg7[%c1, %c0_37, %c0_38] : memref<4x8x1xf32, #tpu.memory_space<vmem>>, vector<1x8x1xf32>
    %56 = vector.shape_cast %55 : vector<1x8x1xf32> to vector<8x1xf32>
    %cst_39 = arith.constant dense<0xFF800000> : vector<8xf32>
    %57 = vector.multi_reduction <maximumf>, %54, %cst_39 [1] : vector<8x8xf32> to vector<8xf32>
    %58 = vector.shape_cast %57 : vector<8xf32> to vector<8x1xf32>
    %59 = arith.maximumf %56, %58 : vector<8x1xf32>
    %60 = arith.subf %56, %59 : vector<8x1xf32>
    %61 = math.exp %60 : vector<8x1xf32>
    %62 = vector.broadcast %59 : vector<8x1xf32> to vector<8x8xf32>
    %63 = arith.subf %54, %62 : vector<8x8xf32>
    %64 = math.exp %63 : vector<8x8xf32>
    %c1_40 = arith.constant 1 : index
    %c0_41 = arith.constant 0 : index
    %c0_42 = arith.constant 0 : index
    %65 = vector.load %arg8[%c1_40, %c0_41, %c0_42] : memref<4x8x1xf32, #tpu.memory_space<vmem>>, vector<1x8x1xf32>
    %66 = vector.shape_cast %65 : vector<1x8x1xf32> to vector<8x1xf32>
    %67 = arith.mulf %61, %66 : vector<8x1xf32>
    %cst_43 = arith.constant dense<0.000000e+00> : vector<8xf32>
    %68 = vector.multi_reduction <add>, %64, %cst_43 [1] : vector<8x8xf32> to vector<8xf32>
    %69 = vector.shape_cast %68 : vector<8xf32> to vector<8x1xf32>
    %70 = arith.addf %67, %69 : vector<8x1xf32>
    %c1_44 = arith.constant 1 : index
    %c0_45 = arith.constant 0 : index
    %c0_46 = arith.constant 0 : index
    %71 = vector.load %arg8[%c1_44, %c0_45, %c0_46] : memref<4x8x1xf32, #tpu.memory_space<vmem>>, vector<1x8x1xf32>
    %72 = vector.shape_cast %71 : vector<1x8x1xf32> to vector<8x1xf32>
    %73 = vector.shape_cast %70 : vector<8x1xf32> to vector<1x8x1xf32>
    tpu.vector_store %arg8[%c1_44, %c0_45, %c0_46], %73 {strides = array<i32>} : memref<4x8x1xf32, #tpu.memory_space<vmem>>, vector<1x8x1xf32>,
    %c1_47 = arith.constant 1 : index
    %c0_48 = arith.constant 0 : index
    %c0_49 = arith.constant 0 : index
    %74 = vector.load %arg9[%c1_47, %c0_48, %c0_49] : memref<4x8x8xf32, #tpu.memory_space<vmem>>, vector<1x8x8xf32>
    %75 = vector.shape_cast %74 : vector<1x8x8xf32> to vector<8x8xf32>
    %76 = vector.broadcast %61 : vector<8x1xf32> to vector<8x8xf32>
    %77 = arith.mulf %76, %75 : vector<8x8xf32>
    %78 = arith.truncf %64 : vector<8x8xf32> to vector<8x8xbf16>
    %cst_50 = arith.constant dense<0.000000e+00> : vector<8x8xf32>
    %79 = tpu.matmul %78, %53, %cst_50 {dimension_numbers = #tpu.dot_dimension_numbers<[1], [0], [0], [1], [0, 0, 1, 1], [], []>} : vector<8x8xbf16>, vector<8x8xbf16>, vector<8x8xf32> -> vector<8x8xf32>
    %80 = arith.addf %77, %79 : vector<8x8xf32>
    %c1_51 = arith.constant 1 : index
    %c0_52 = arith.constant 0 : index
    %c0_53 = arith.constant 0 : index
    %81 = vector.load %arg9[%c1_51, %c0_52, %c0_53] : memref<4x8x8xf32, #tpu.memory_space<vmem>>, vector<1x8x8xf32>
    %82 = vector.shape_cast %81 : vector<1x8x8xf32> to vector<8x8xf32>
    %83 = vector.shape_cast %80 : vector<8x8xf32> to vector<1x8x8xf32>
    tpu.vector_store %arg9[%c1_51, %c0_52, %c0_53], %83 {strides = array<i32>} : memref<4x8x8xf32, #tpu.memory_space<vmem>>, vector<1x8x8xf32>,
    %c1_54 = arith.constant 1 : index
    %c0_55 = arith.constant 0 : index
    %c0_56 = arith.constant 0 : index
    %84 = vector.load %arg7[%c1_54, %c0_55, %c0_56] : memref<4x8x1xf32, #tpu.memory_space<vmem>>, vector<1x8x1xf32>
    %85 = vector.shape_cast %84 : vector<1x8x1xf32> to vector<8x1xf32>
    %86 = vector.shape_cast %59 : vector<8x1xf32> to vector<1x8x1xf32>
    tpu.vector_store %arg7[%c1_54, %c0_55, %c0_56], %86 {strides = array<i32>} : memref<4x8x1xf32, #tpu.memory_space<vmem>>, vector<1x8x1xf32>,
    %87 = vector.extract_strided_slice %4 {offsets = [0, 2, 0], sizes = [8, 1, 8], strides = [1, 1, 1]} : vector<8x4x8xbf16> to vector<8x1x8xbf16>
    %88 = vector.shape_cast %87 : vector<8x1x8xbf16> to vector<8x8xbf16>
    %89 = vector.extract_strided_slice %6 {offsets = [0, 2, 0], sizes = [8, 1, 8], strides = [1, 1, 1]} : vector<8x4x8xbf16> to vector<8x1x8xbf16>
    %90 = vector.shape_cast %89 : vector<8x1x8xbf16> to vector<8x8xbf16>
    %91 = vector.extract_strided_slice %8 {offsets = [0, 2, 0], sizes = [8, 1, 8], strides = [1, 1, 1]} : vector<8x4x8xbf16> to vector<8x1x8xbf16>
    %92 = vector.shape_cast %91 : vector<8x1x8xbf16> to vector<8x8xbf16>
    %cst_57 = arith.constant dense<0.000000e+00> : vector<8x8xf32>
    %93 = tpu.matmul %88, %90, %cst_57 {dimension_numbers = #tpu.dot_dimension_numbers<[1], [1], [0], [0], [0, 0, 1, 0], [], []>} : vector<8x8xbf16>, vector<8x8xbf16>, vector<8x8xf32> -> vector<8x8xf32>
    %c2 = arith.constant 2 : index
    %c0_58 = arith.constant 0 : index
    %c0_59 = arith.constant 0 : index
    %94 = vector.load %arg7[%c2, %c0_58, %c0_59] : memref<4x8x1xf32, #tpu.memory_space<vmem>>, vector<1x8x1xf32>
    %95 = vector.shape_cast %94 : vector<1x8x1xf32> to vector<8x1xf32>
    %cst_60 = arith.constant dense<0xFF800000> : vector<8xf32>
    %96 = vector.multi_reduction <maximumf>, %93, %cst_60 [1] : vector<8x8xf32> to vector<8xf32>
    %97 = vector.shape_cast %96 : vector<8xf32> to vector<8x1xf32>
    %98 = arith.maximumf %95, %97 : vector<8x1xf32>
    %99 = arith.subf %95, %98 : vector<8x1xf32>
    %100 = math.exp %99 : vector<8x1xf32>
    %101 = vector.broadcast %98 : vector<8x1xf32> to vector<8x8xf32>
    %102 = arith.subf %93, %101 : vector<8x8xf32>
    %103 = math.exp %102 : vector<8x8xf32>
    %c2_61 = arith.constant 2 : index
    %c0_62 = arith.constant 0 : index
    %c0_63 = arith.constant 0 : index
    %104 = vector.load %arg8[%c2_61, %c0_62, %c0_63] : memref<4x8x1xf32, #tpu.memory_space<vmem>>, vector<1x8x1xf32>
    %105 = vector.shape_cast %104 : vector<1x8x1xf32> to vector<8x1xf32>
    %106 = arith.mulf %100, %105 : vector<8x1xf32>
    %cst_64 = arith.constant dense<0.000000e+00> : vector<8xf32>
    %107 = vector.multi_reduction <add>, %103, %cst_64 [1] : vector<8x8xf32> to vector<8xf32>
    %108 = vector.shape_cast %107 : vector<8xf32> to vector<8x1xf32>
    %109 = arith.addf %106, %108 : vector<8x1xf32>
    %c2_65 = arith.constant 2 : index
    %c0_66 = arith.constant 0 : index
    %c0_67 = arith.constant 0 : index
    %110 = vector.load %arg8[%c2_65, %c0_66, %c0_67] : memref<4x8x1xf32, #tpu.memory_space<vmem>>, vector<1x8x1xf32>
    %111 = vector.shape_cast %110 : vector<1x8x1xf32> to vector<8x1xf32>
    %112 = vector.shape_cast %109 : vector<8x1xf32> to vector<1x8x1xf32>
    tpu.vector_store %arg8[%c2_65, %c0_66, %c0_67], %112 {strides = array<i32>} : memref<4x8x1xf32, #tpu.memory_space<vmem>>, vector<1x8x1xf32>,
    %c2_68 = arith.constant 2 : index
    %c0_69 = arith.constant 0 : index
    %c0_70 = arith.constant 0 : index
    %113 = vector.load %arg9[%c2_68, %c0_69, %c0_70] : memref<4x8x8xf32, #tpu.memory_space<vmem>>, vector<1x8x8xf32>
    %114 = vector.shape_cast %113 : vector<1x8x8xf32> to vector<8x8xf32>
    %115 = vector.broadcast %100 : vector<8x1xf32> to vector<8x8xf32>
    %116 = arith.mulf %115, %114 : vector<8x8xf32>
    %117 = arith.truncf %103 : vector<8x8xf32> to vector<8x8xbf16>
    %cst_71 = arith.constant dense<0.000000e+00> : vector<8x8xf32>
    %118 = tpu.matmul %117, %92, %cst_71 {dimension_numbers = #tpu.dot_dimension_numbers<[1], [0], [0], [1], [0, 0, 1, 1], [], []>} : vector<8x8xbf16>, vector<8x8xbf16>, vector<8x8xf32> -> vector<8x8xf32>
    %119 = arith.addf %116, %118 : vector<8x8xf32>
    %c2_72 = arith.constant 2 : index
    %c0_73 = arith.constant 0 : index
    %c0_74 = arith.constant 0 : index
    %120 = vector.load %arg9[%c2_72, %c0_73, %c0_74] : memref<4x8x8xf32, #tpu.memory_space<vmem>>, vector<1x8x8xf32>
    %121 = vector.shape_cast %120 : vector<1x8x8xf32> to vector<8x8xf32>
    %122 = vector.shape_cast %119 : vector<8x8xf32> to vector<1x8x8xf32>
    tpu.vector_store %arg9[%c2_72, %c0_73, %c0_74], %122 {strides = array<i32>} : memref<4x8x8xf32, #tpu.memory_space<vmem>>, vector<1x8x8xf32>,
    %c2_75 = arith.constant 2 : index
    %c0_76 = arith.constant 0 : index
    %c0_77 = arith.constant 0 : index
    %123 = vector.load %arg7[%c2_75, %c0_76, %c0_77] : memref<4x8x1xf32, #tpu.memory_space<vmem>>, vector<1x8x1xf32>
    %124 = vector.shape_cast %123 : vector<1x8x1xf32> to vector<8x1xf32>
    %125 = vector.shape_cast %98 : vector<8x1xf32> to vector<1x8x1xf32>
    tpu.vector_store %arg7[%c2_75, %c0_76, %c0_77], %125 {strides = array<i32>} : memref<4x8x1xf32, #tpu.memory_space<vmem>>, vector<1x8x1xf32>,
    %126 = vector.extract_strided_slice %4 {offsets = [0, 3, 0], sizes = [8, 1, 8], strides = [1, 1, 1]} : vector<8x4x8xbf16> to vector<8x1x8xbf16>
    %127 = vector.shape_cast %126 : vector<8x1x8xbf16> to vector<8x8xbf16>
    %128 = vector.extract_strided_slice %6 {offsets = [0, 3, 0], sizes = [8, 1, 8], strides = [1, 1, 1]} : vector<8x4x8xbf16> to vector<8x1x8xbf16>
    %129 = vector.shape_cast %128 : vector<8x1x8xbf16> to vector<8x8xbf16>
    %130 = vector.extract_strided_slice %8 {offsets = [0, 3, 0], sizes = [8, 1, 8], strides = [1, 1, 1]} : vector<8x4x8xbf16> to vector<8x1x8xbf16>
    %131 = vector.shape_cast %130 : vector<8x1x8xbf16> to vector<8x8xbf16>
    %cst_78 = arith.constant dense<0.000000e+00> : vector<8x8xf32>
    %132 = tpu.matmul %127, %129, %cst_78 {dimension_numbers = #tpu.dot_dimension_numbers<[1], [1], [0], [0], [0, 0, 1, 0], [], []>} : vector<8x8xbf16>, vector<8x8xbf16>, vector<8x8xf32> -> vector<8x8xf32>
    %c3 = arith.constant 3 : index
    %c0_79 = arith.constant 0 : index
    %c0_80 = arith.constant 0 : index
    %133 = vector.load %arg7[%c3, %c0_79, %c0_80] : memref<4x8x1xf32, #tpu.memory_space<vmem>>, vector<1x8x1xf32>
    %134 = vector.shape_cast %133 : vector<1x8x1xf32> to vector<8x1xf32>
    %cst_81 = arith.constant dense<0xFF800000> : vector<8xf32>
    %135 = vector.multi_reduction <maximumf>, %132, %cst_81 [1] : vector<8x8xf32> to vector<8xf32>
    %136 = vector.shape_cast %135 : vector<8xf32> to vector<8x1xf32>
    %137 = arith.maximumf %134, %136 : vector<8x1xf32>
    %138 = arith.subf %134, %137 : vector<8x1xf32>
    %139 = math.exp %138 : vector<8x1xf32>
    %140 = vector.broadcast %137 : vector<8x1xf32> to vector<8x8xf32>
    %141 = arith.subf %132, %140 : vector<8x8xf32>
    %142 = math.exp %141 : vector<8x8xf32>
    %c3_82 = arith.constant 3 : index
    %c0_83 = arith.constant 0 : index
    %c0_84 = arith.constant 0 : index
    %143 = vector.load %arg8[%c3_82, %c0_83, %c0_84] : memref<4x8x1xf32, #tpu.memory_space<vmem>>, vector<1x8x1xf32>
    %144 = vector.shape_cast %143 : vector<1x8x1xf32> to vector<8x1xf32>
    %145 = arith.mulf %139, %144 : vector<8x1xf32>
    %cst_85 = arith.constant dense<0.000000e+00> : vector<8xf32>
    %146 = vector.multi_reduction <add>, %142, %cst_85 [1] : vector<8x8xf32> to vector<8xf32>
    %147 = vector.shape_cast %146 : vector<8xf32> to vector<8x1xf32>
    %148 = arith.addf %145, %147 : vector<8x1xf32>
    %c3_86 = arith.constant 3 : index
    %c0_87 = arith.constant 0 : index
    %c0_88 = arith.constant 0 : index
    %149 = vector.load %arg8[%c3_86, %c0_87, %c0_88] : memref<4x8x1xf32, #tpu.memory_space<vmem>>, vector<1x8x1xf32>
    %150 = vector.shape_cast %149 : vector<1x8x1xf32> to vector<8x1xf32>
    %151 = vector.shape_cast %148 : vector<8x1xf32> to vector<1x8x1xf32>
    tpu.vector_store %arg8[%c3_86, %c0_87, %c0_88], %151 {strides = array<i32>} : memref<4x8x1xf32, #tpu.memory_space<vmem>>, vector<1x8x1xf32>,
    %c3_89 = arith.constant 3 : index
    %c0_90 = arith.constant 0 : index
    %c0_91 = arith.constant 0 : index
    %152 = vector.load %arg9[%c3_89, %c0_90, %c0_91] : memref<4x8x8xf32, #tpu.memory_space<vmem>>, vector<1x8x8xf32>
    %153 = vector.shape_cast %152 : vector<1x8x8xf32> to vector<8x8xf32>
    %154 = vector.broadcast %139 : vector<8x1xf32> to vector<8x8xf32>
    %155 = arith.mulf %154, %153 : vector<8x8xf32>
    %156 = arith.truncf %142 : vector<8x8xf32> to vector<8x8xbf16>
    %cst_92 = arith.constant dense<0.000000e+00> : vector<8x8xf32>
    %157 = tpu.matmul %156, %131, %cst_92 {dimension_numbers = #tpu.dot_dimension_numbers<[1], [0], [0], [1], [0, 0, 1, 1], [], []>} : vector<8x8xbf16>, vector<8x8xbf16>, vector<8x8xf32> -> vector<8x8xf32>
    %158 = arith.addf %155, %157 : vector<8x8xf32>
    %c3_93 = arith.constant 3 : index
    %c0_94 = arith.constant 0 : index
    %c0_95 = arith.constant 0 : index
    %159 = vector.load %arg9[%c3_93, %c0_94, %c0_95] : memref<4x8x8xf32, #tpu.memory_space<vmem>>, vector<1x8x8xf32>
    %160 = vector.shape_cast %159 : vector<1x8x8xf32> to vector<8x8xf32>
    %161 = vector.shape_cast %158 : vector<8x8xf32> to vector<1x8x8xf32>
    tpu.vector_store %arg9[%c3_93, %c0_94, %c0_95], %161 {strides = array<i32>} : memref<4x8x8xf32, #tpu.memory_space<vmem>>, vector<1x8x8xf32>,
    %c3_96 = arith.constant 3 : index
    %c0_97 = arith.constant 0 : index
    %c0_98 = arith.constant 0 : index
    %162 = vector.load %arg7[%c3_96, %c0_97, %c0_98] : memref<4x8x1xf32, #tpu.memory_space<vmem>>, vector<1x8x1xf32>
    %163 = vector.shape_cast %162 : vector<1x8x1xf32> to vector<8x1xf32>
    %164 = vector.shape_cast %137 : vector<8x1xf32> to vector<1x8x1xf32>
    tpu.vector_store %arg7[%c3_96, %c0_97, %c0_98], %164 {strides = array<i32>} : memref<4x8x1xf32, #tpu.memory_space<vmem>>, vector<1x8x1xf32>,
    %c0_i32_99 = arith.constant 0 : i32
    %165 = arith.cmpi eq, %arg2, %c0_i32_99 : i32
    %166 = arith.extui %165 : i1 to i32
    %c0_i32_100 = arith.constant 0 : i32
    %167 = arith.cmpi ne, %166, %c0_i32_100 : i32
    scf.if %167 {
      %c0_101 = arith.constant 0 : index
      %c0_102 = arith.constant 0 : index
      %c0_103 = arith.constant 0 : index
      %168 = vector.load %arg9[%c0_101, %c0_102, %c0_103] : memref<4x8x8xf32, #tpu.memory_space<vmem>>, vector<1x8x8xf32>
      %169 = vector.shape_cast %168 : vector<1x8x8xf32> to vector<8x8xf32>
      %c0_104 = arith.constant 0 : index
      %c0_105 = arith.constant 0 : index
      %c0_106 = arith.constant 0 : index
      %170 = vector.load %arg8[%c0_104, %c0_105, %c0_106] : memref<4x8x1xf32, #tpu.memory_space<vmem>>, vector<1x8x1xf32>
      %171 = vector.shape_cast %170 : vector<1x8x1xf32> to vector<8x1xf32>
      %172 = vector.broadcast %171 : vector<8x1xf32> to vector<8x8xf32>
      %173 = arith.divf %169, %172 : vector<8x8xf32>
      %174 = arith.truncf %173 : vector<8x8xf32> to vector<8x8xbf16>
      %c1_107 = arith.constant 1 : index
      %c0_108 = arith.constant 0 : index
      %c0_109 = arith.constant 0 : index
      %175 = vector.load %arg9[%c1_107, %c0_108, %c0_109] : memref<4x8x8xf32, #tpu.memory_space<vmem>>, vector<1x8x8xf32>
      %176 = vector.shape_cast %175 : vector<1x8x8xf32> to vector<8x8xf32>
      %c1_110 = arith.constant 1 : index
      %c0_111 = arith.constant 0 : index
      %c0_112 = arith.constant 0 : index
      %177 = vector.load %arg8[%c1_110, %c0_111, %c0_112] : memref<4x8x1xf32, #tpu.memory_space<vmem>>, vector<1x8x1xf32>
      %178 = vector.shape_cast %177 : vector<1x8x1xf32> to vector<8x1xf32>
      %179 = vector.broadcast %178 : vector<8x1xf32> to vector<8x8xf32>
      %180 = arith.divf %176, %179 : vector<8x8xf32>
      %181 = arith.truncf %180 : vector<8x8xf32> to vector<8x8xbf16>
      %c2_113 = arith.constant 2 : index
      %c0_114 = arith.constant 0 : index
      %c0_115 = arith.constant 0 : index
      %182 = vector.load %arg9[%c2_113, %c0_114, %c0_115] : memref<4x8x8xf32, #tpu.memory_space<vmem>>, vector<1x8x8xf32>
      %183 = vector.shape_cast %182 : vector<1x8x8xf32> to vector<8x8xf32>
      %c2_116 = arith.constant 2 : index
      %c0_117 = arith.constant 0 : index
      %c0_118 = arith.constant 0 : index
      %184 = vector.load %arg8[%c2_116, %c0_117, %c0_118] : memref<4x8x1xf32, #tpu.memory_space<vmem>>, vector<1x8x1xf32>
      %185 = vector.shape_cast %184 : vector<1x8x1xf32> to vector<8x1xf32>
      %186 = vector.broadcast %185 : vector<8x1xf32> to vector<8x8xf32>
      %187 = arith.divf %183, %186 : vector<8x8xf32>
      %188 = arith.truncf %187 : vector<8x8xf32> to vector<8x8xbf16>
      %c3_119 = arith.constant 3 : index
      %c0_120 = arith.constant 0 : index
      %c0_121 = arith.constant 0 : index
      %189 = vector.load %arg9[%c3_119, %c0_120, %c0_121] : memref<4x8x8xf32, #tpu.memory_space<vmem>>, vector<1x8x8xf32>
      %190 = vector.shape_cast %189 : vector<1x8x8xf32> to vector<8x8xf32>
      %c3_122 = arith.constant 3 : index
      %c0_123 = arith.constant 0 : index
      %c0_124 = arith.constant 0 : index
      %191 = vector.load %arg8[%c3_122, %c0_123, %c0_124] : memref<4x8x1xf32, #tpu.memory_space<vmem>>, vector<1x8x1xf32>
      %192 = vector.shape_cast %191 : vector<1x8x1xf32> to vector<8x1xf32>
      %193 = vector.broadcast %192 : vector<8x1xf32> to vector<8x8xf32>
      %194 = arith.divf %190, %193 : vector<8x8xf32>
      %195 = arith.truncf %194 : vector<8x8xf32> to vector<8x8xbf16>
      %196 = tpu.concatenate %174, %181, %188, %195 in 1 : vector<8x8xbf16>, vector<8x8xbf16>, vector<8x8xbf16>, vector<8x8xbf16> -> vector<8x32xbf16>
      %c0_125 = arith.constant 0 : index
      %c0_126 = arith.constant 0 : index
      %c0_127 = arith.constant 0 : index
      %197 = vector.load %arg6[%c0_125, %c0_126, %c0_127] : memref<1x8x32xbf16, #tpu.memory_space<vmem>>, vector<1x8x32xbf16>
      %198 = vector.shape_cast %197 : vector<1x8x32xbf16> to vector<8x32xbf16>
      %199 = vector.shape_cast %196 : vector<8x32xbf16> to vector<1x8x32xbf16>
      tpu.vector_store %arg6[%c0_125, %c0_126, %c0_127], %199 {strides = array<i32>} : memref<1x8x32xbf16, #tpu.memory_space<vmem>>, vector<1x8x32xbf16>,
    } else {
    }
    return
  }
  func.func @transform_0(%arg0: i32, %arg1: i32, %arg2: i32) -> (i32, i32, i32, i32, i32) {
    %c0_i32 = arith.constant 0 : i32
    %c0_i32_0 = arith.constant 0 : i32
    %c0_i32_1 = arith.constant 0 : i32
    %c0_i32_2 = arith.constant 0 : i32
    return %arg0, %arg1, %c0_i32, %c0_i32_0, %c0_i32_1 : i32, i32, i32, i32, i32
  }
  func.func @transform_1(%arg0: i32, %arg1: i32, %arg2: i32) -> (i32, i32, i32, i32, i32) {
    %c1_i32 = arith.constant 1 : i32
    %c0_i32 = arith.constant 0 : i32
    %c0_i32_0 = arith.constant 0 : i32
    %c0_i32_1 = arith.constant 0 : i32
    return %arg0, %arg2, %c1_i32, %c0_i32, %c0_i32_0 : i32, i32, i32, i32, i32
  }
  func.func @transform_2(%arg0: i32, %arg1: i32, %arg2: i32) -> (i32, i32, i32, i32, i32) {
    %c2_i32 = arith.constant 2 : i32
    %c0_i32 = arith.constant 0 : i32
    %c0_i32_0 = arith.constant 0 : i32
    %c0_i32_1 = arith.constant 0 : i32
    return %arg0, %arg2, %c2_i32, %c0_i32, %c0_i32_0 : i32, i32, i32, i32, i32
  }
  func.func @transform_3(%arg0: i32, %arg1: i32, %arg2: i32) -> (i32, i32, i32) {
    %c0_i32 = arith.constant 0 : i32
    %c0_i32_0 = arith.constant 0 : i32
    return %arg0, %arg1, %c0_i32 : i32, i32, i32
  }
}

module attributes {stable_mosaic.version = 11 : i64} {
  func.func @_linear_kernel(%arg0: i32, %arg1: i32, %arg2: i32, %arg3: memref<16x32xbf16, #tpu.memory_space<vmem>>, %arg4: memref<32x96xbf16, #tpu.memory_space<vmem>>, %arg5: memref<1x96xf32, #tpu.memory_space<vmem>>, %arg6: memref<16x96xbf16, #tpu.memory_space<vmem>>, %arg7: memref<16x96xf32, #tpu.memory_space<vmem>>) attributes {dimension_semantics = [#tpu.dimension_semantics<parallel>, #tpu.dimension_semantics<parallel>, #tpu.dimension_semantics<arbitrary>], iteration_bounds = array<i64: 1, 1, 1>, scalar_prefetch = 0 : i64, scratch_operands = 1 : i64, tpu.core_type = #tpu.core_type<tc>, window_params = [{transform_indices = @transform_0, window_bounds = array<i64: 16, 32>}, {transform_indices = @transform_1, window_bounds = array<i64: 32, 96>}, {transform_indices = @transform_2, window_bounds = array<i64: 1, 96>}, {transform_indices = @transform_3, window_bounds = array<i64: 16, 96>}]} {
    %c0_i32 = arith.constant 0 : i32
    %0 = arith.cmpi eq, %arg2, %c0_i32 : i32
    %1 = arith.extui %0 : i1 to i32
    %c0_i32_0 = arith.constant 0 : i32
    %2 = arith.cmpi ne, %1, %c0_i32_0 : i32
    scf.if %2 {
      %cst_10 = arith.constant 0.000000e+00 : f32
      %12 = vector.broadcast %cst_10 : f32 to vector<16x96xf32>
      %c0_11 = arith.constant 0 : index
      %c0_12 = arith.constant 0 : index
      %13 = vector.load %arg7[%c0_11, %c0_12] : memref<16x96xf32, #tpu.memory_space<vmem>>, vector<16x96xf32>
      tpu.vector_store %arg7[%c0_11, %c0_12], %12 {strides = array<i32>} : memref<16x96xf32, #tpu.memory_space<vmem>>, vector<16x96xf32>,
    } else {
    }
    %c0 = arith.constant 0 : index
    %c0_1 = arith.constant 0 : index
    %3 = vector.load %arg7[%c0, %c0_1] : memref<16x96xf32, #tpu.memory_space<vmem>>, vector<16x96xf32>
    %c0_2 = arith.constant 0 : index
    %c0_3 = arith.constant 0 : index
    %4 = vector.load %arg3[%c0_2, %c0_3] : memref<16x32xbf16, #tpu.memory_space<vmem>>, vector<16x32xbf16>
    %c0_4 = arith.constant 0 : index
    %c0_5 = arith.constant 0 : index
    %5 = vector.load %arg4[%c0_4, %c0_5] : memref<32x96xbf16, #tpu.memory_space<vmem>>, vector<32x96xbf16>
    %cst = arith.constant dense<0.000000e+00> : vector<16x96xf32>
    %6 = tpu.matmul %4, %5, %cst {dimension_numbers = #tpu.dot_dimension_numbers<[1], [0], [0], [1], [0, 0, 1, 1], [], []>} : vector<16x32xbf16>, vector<32x96xbf16>, vector<16x96xf32> -> vector<16x96xf32>
    %7 = arith.addf %3, %6 : vector<16x96xf32>
    %c0_6 = arith.constant 0 : index
    %c0_7 = arith.constant 0 : index
    %8 = vector.load %arg7[%c0_6, %c0_7] : memref<16x96xf32, #tpu.memory_space<vmem>>, vector<16x96xf32>
    tpu.vector_store %arg7[%c0_6, %c0_7], %7 {strides = array<i32>} : memref<16x96xf32, #tpu.memory_space<vmem>>, vector<16x96xf32>,
    %c0_i32_8 = arith.constant 0 : i32
    %9 = arith.cmpi eq, %arg2, %c0_i32_8 : i32
    %10 = arith.extui %9 : i1 to i32
    %c0_i32_9 = arith.constant 0 : i32
    %11 = arith.cmpi ne, %10, %c0_i32_9 : i32
    scf.if %11 {
      %c0_10 = arith.constant 0 : index
      %c0_11 = arith.constant 0 : index
      %12 = vector.load %arg7[%c0_10, %c0_11] : memref<16x96xf32, #tpu.memory_space<vmem>>, vector<16x96xf32>
      %c0_12 = arith.constant 0 : index
      %c0_13 = arith.constant 0 : index
      %13 = vector.load %arg5[%c0_12, %c0_13] : memref<1x96xf32, #tpu.memory_space<vmem>>, vector<1x96xf32>
      %14 = vector.broadcast %13 : vector<1x96xf32> to vector<16x96xf32>
      %15 = arith.addf %12, %14 : vector<16x96xf32>
      %16 = arith.truncf %15 : vector<16x96xf32> to vector<16x96xbf16>
      %c0_14 = arith.constant 0 : index
      %c0_15 = arith.constant 0 : index
      %17 = vector.load %arg6[%c0_14, %c0_15] : memref<16x96xbf16, #tpu.memory_space<vmem>>, vector<16x96xbf16>
      tpu.vector_store %arg6[%c0_14, %c0_15], %16 {strides = array<i32>} : memref<16x96xbf16, #tpu.memory_space<vmem>>, vector<16x96xbf16>,
    } else {
    }
    return
  }
  func.func @transform_0(%arg0: i32, %arg1: i32, %arg2: i32) -> (i32, i32) {
    %c0_i32 = arith.constant 0 : i32
    return %arg0, %arg2 : i32, i32
  }
  func.func @transform_1(%arg0: i32, %arg1: i32, %arg2: i32) -> (i32, i32) {
    %c0_i32 = arith.constant 0 : i32
    return %arg2, %arg1 : i32, i32
  }
  func.func @transform_2(%arg0: i32, %arg1: i32, %arg2: i32) -> (i32, i32) {
    %c0_i32 = arith.constant 0 : i32
    %c0_i32_0 = arith.constant 0 : i32
    return %c0_i32, %arg1 : i32, i32
  }
  func.func @transform_3(%arg0: i32, %arg1: i32, %arg2: i32) -> (i32, i32) {
    %c0_i32 = arith.constant 0 : i32
    return %arg0, %arg1 : i32, i32
  }
}

module attributes {stable_mosaic.version = 11 : i64} {
  func.func @_linear_kernel(%arg0: i32, %arg1: i32, %arg2: i32, %arg3: memref<16x32xbf16, #tpu.memory_space<vmem>>, %arg4: memref<32x32xbf16, #tpu.memory_space<vmem>>, %arg5: memref<1x32xf32, #tpu.memory_space<vmem>>, %arg6: memref<16x32xf32, #tpu.memory_space<vmem>>, %arg7: memref<16x32xf32, #tpu.memory_space<vmem>>) attributes {dimension_semantics = [#tpu.dimension_semantics<parallel>, #tpu.dimension_semantics<parallel>, #tpu.dimension_semantics<arbitrary>], iteration_bounds = array<i64: 1, 1, 1>, scalar_prefetch = 0 : i64, scratch_operands = 1 : i64, tpu.core_type = #tpu.core_type<tc>, window_params = [{transform_indices = @transform_0, window_bounds = array<i64: 16, 32>}, {transform_indices = @transform_1, window_bounds = array<i64: 32, 32>}, {transform_indices = @transform_2, window_bounds = array<i64: 1, 32>}, {transform_indices = @transform_3, window_bounds = array<i64: 16, 32>}]} {
    %c0_i32 = arith.constant 0 : i32
    %0 = arith.cmpi eq, %arg2, %c0_i32 : i32
    %1 = arith.extui %0 : i1 to i32
    %c0_i32_0 = arith.constant 0 : i32
    %2 = arith.cmpi ne, %1, %c0_i32_0 : i32
    scf.if %2 {
      %cst_10 = arith.constant 0.000000e+00 : f32
      %12 = vector.broadcast %cst_10 : f32 to vector<16x32xf32>
      %c0_11 = arith.constant 0 : index
      %c0_12 = arith.constant 0 : index
      %13 = vector.load %arg7[%c0_11, %c0_12] : memref<16x32xf32, #tpu.memory_space<vmem>>, vector<16x32xf32>
      tpu.vector_store %arg7[%c0_11, %c0_12], %12 {strides = array<i32>} : memref<16x32xf32, #tpu.memory_space<vmem>>, vector<16x32xf32>,
    } else {
    }
    %c0 = arith.constant 0 : index
    %c0_1 = arith.constant 0 : index
    %3 = vector.load %arg7[%c0, %c0_1] : memref<16x32xf32, #tpu.memory_space<vmem>>, vector<16x32xf32>
    %c0_2 = arith.constant 0 : index
    %c0_3 = arith.constant 0 : index
    %4 = vector.load %arg3[%c0_2, %c0_3] : memref<16x32xbf16, #tpu.memory_space<vmem>>, vector<16x32xbf16>
    %c0_4 = arith.constant 0 : index
    %c0_5 = arith.constant 0 : index
    %5 = vector.load %arg4[%c0_4, %c0_5] : memref<32x32xbf16, #tpu.memory_space<vmem>>, vector<32x32xbf16>
    %cst = arith.constant dense<0.000000e+00> : vector<16x32xf32>
    %6 = tpu.matmul %4, %5, %cst {dimension_numbers = #tpu.dot_dimension_numbers<[1], [0], [0], [1], [0, 0, 1, 1], [], []>} : vector<16x32xbf16>, vector<32x32xbf16>, vector<16x32xf32> -> vector<16x32xf32>
    %7 = arith.addf %3, %6 : vector<16x32xf32>
    %c0_6 = arith.constant 0 : index
    %c0_7 = arith.constant 0 : index
    %8 = vector.load %arg7[%c0_6, %c0_7] : memref<16x32xf32, #tpu.memory_space<vmem>>, vector<16x32xf32>
    tpu.vector_store %arg7[%c0_6, %c0_7], %7 {strides = array<i32>} : memref<16x32xf32, #tpu.memory_space<vmem>>, vector<16x32xf32>,
    %c0_i32_8 = arith.constant 0 : i32
    %9 = arith.cmpi eq, %arg2, %c0_i32_8 : i32
    %10 = arith.extui %9 : i1 to i32
    %c0_i32_9 = arith.constant 0 : i32
    %11 = arith.cmpi ne, %10, %c0_i32_9 : i32
    scf.if %11 {
      %c0_10 = arith.constant 0 : index
      %c0_11 = arith.constant 0 : index
      %12 = vector.load %arg7[%c0_10, %c0_11] : memref<16x32xf32, #tpu.memory_space<vmem>>, vector<16x32xf32>
      %c0_12 = arith.constant 0 : index
      %c0_13 = arith.constant 0 : index
      %13 = vector.load %arg5[%c0_12, %c0_13] : memref<1x32xf32, #tpu.memory_space<vmem>>, vector<1x32xf32>
      %14 = vector.broadcast %13 : vector<1x32xf32> to vector<16x32xf32>
      %15 = arith.addf %12, %14 : vector<16x32xf32>
      %c0_14 = arith.constant 0 : index
      %c0_15 = arith.constant 0 : index
      %16 = vector.load %arg6[%c0_14, %c0_15] : memref<16x32xf32, #tpu.memory_space<vmem>>, vector<16x32xf32>
      tpu.vector_store %arg6[%c0_14, %c0_15], %15 {strides = array<i32>} : memref<16x32xf32, #tpu.memory_space<vmem>>, vector<16x32xf32>,
    } else {
    }
    return
  }
  func.func @transform_0(%arg0: i32, %arg1: i32, %arg2: i32) -> (i32, i32) {
    %c0_i32 = arith.constant 0 : i32
    return %arg0, %arg2 : i32, i32
  }
  func.func @transform_1(%arg0: i32, %arg1: i32, %arg2: i32) -> (i32, i32) {
    %c0_i32 = arith.constant 0 : i32
    return %arg2, %arg1 : i32, i32
  }
  func.func @transform_2(%arg0: i32, %arg1: i32, %arg2: i32) -> (i32, i32) {
    %c0_i32 = arith.constant 0 : i32
    %c0_i32_0 = arith.constant 0 : i32
    return %c0_i32, %arg1 : i32, i32
  }
  func.func @transform_3(%arg0: i32, %arg1: i32, %arg2: i32) -> (i32, i32) {
    %c0_i32 = arith.constant 0 : i32
    return %arg0, %arg1 : i32, i32
  }
}

</mosaic_0001>

<llo_original>
// kernel: mha_forward_self.3
$region0: #{mha_forward_self.3}
  #allocation0 [shape = 'u32[]', space=smem, size = 0x4, offset = 0x4, fixed_abs, tag = 'smem constant byte address 0x4 - core index']
  #allocation1 [shape = 'u32[144,128]{1,0:T(1,128)}', space=vmem, size = 0x12000, scoped, tag = 'internal scratch']
  #allocation2 [shape = 'f32[16,96]{1,0:T(8,128)}', space=vmem, size = 0x2000, scoped, tag = 'scratch operand']
  %s0 = inlined_call_operand.vmem [shape: bf16[16,32], index: 0, kind: input, shape index: {}]
  %s1 = inlined_call_operand.vmem [shape: bf16[32,96], index: 1, kind: input, shape index: {}]
  %s2 = inlined_call_operand.vmem [shape: f32[1,96], index: 2, kind: input, shape index: {}]
  %s3 = inlined_call_operand.vmem [shape: bf16[16,96], index: 3, kind: output, shape index: {}]
  %s4 = sld [smem:[#allocation0]]
  $region30: #{mha_forward_self.3} parent=0
    _
  %s6 = ssub.s32 1, %s4
  %s7 = scalar_select 0, %s6, %s4
  // Predicated region
  $region2: #{mha_forward_self.3} parent=0 // pred_check
    _
  $region3: #{mha_forward_self.3} parent=0 // pred_check_branch
    %9 = sbr.rel (0) target = $region5
  $region4: #{mha_forward_self.3} parent=0 // pred_region
    _
  $region5: #{mha_forward_self.3} parent=0 // pred_fallthru
    _
  // Predicated region
  $region6: #{mha_forward_self.3} parent=0 // pred_check
    _
  $region7: #{mha_forward_self.3} parent=0 // pred_check_branch
    %11 = sbr.rel (0) target = $region9
  $region8: #{mha_forward_self.3} parent=0 // pred_region
    _
  $region9: #{mha_forward_self.3} parent=0 // pred_fallthru
    _
  // Predicated region
  $region10: #{mha_forward_self.3} parent=0 // pred_check
    _
  $region11: #{mha_forward_self.3} parent=0 // pred_check_branch
    %13 = sbr.rel (0) target = $region13
  $region12: #{mha_forward_self.3} parent=0 // pred_region
    _
  $region13: #{mha_forward_self.3} parent=0 // pred_fallthru
    _
  %p15 = scmp.eq.s32.totalorder 0, 0
  // Predicated region
  $region14: #{mha_forward_self.3} parent=0 // pred_check
    %p16 = pneg %p15
  $region15: #{mha_forward_self.3} parent=0 // pred_check_branch
    %18 = sbr.rel (%p16) target = $region17
  $region16: #{mha_forward_self.3} parent=0 // pred_region
    %vm19 = vcmask 785408
    %20 = vst.msk [vmem:[#allocation2] sm:$0xff] %vm19, 0.0
    %21 = vst.msk [vmem:[#allocation2 + $0x8] sm:$0xff] %vm19, 0.0
  $region17: #{mha_forward_self.3} parent=0 // pred_fallthru
    _
  %v22 = vld [vmem:[#allocation2] sm:$0xff]
  %v23 = vld [vmem:[#allocation2 + $0x8] sm:$0xff]
  %v24 = vld [vmem:[%s0] sm:$0xf]
  %v25 = vld [vmem:[%s0 + $0x4] sm:$0xf]
  %v26 = vld [vmem:[%s1] sm:$0xf]
  %v27 = vld [vmem:[%s1 + $0x4] sm:$0xf]
  %v28 = vld [vmem:[%s1 + $0x8] sm:$0xf]
  %v29 = vld [vmem:[%s1 + $0xc] sm:$0xf]
  %v32 = vunpack.c.l.b16 %v24
  %v33 = vunpack.c.l.b16 %v25
  %v34 = vpack.c.b16 %v33, %v32
  %v39 = vunpack.c.l.b16 %v26
  %v40 = vunpack.c.l.b16 %v27
  %v41 = vunpack.c.l.b16 %v28
  %v42 = vunpack.c.l.b16 %v29
  %v43 = vpack.c.b16 %v40, %v39
  %v44 = vpack.c.b16 %v42, %v41
  %vm47 = vcmask 261120
  %v49 = vsel %vm47, %v34, 0
  %51 = vmatprep.subr.bf16.mxu0 0
  %52 = vmatpush1.bf16.msra.mxu0 %v43
  %53 = vmatprep.subr.bf16.mxu0 0
  %54 = vmatpush1.bf16.msra.mxu0 %v44
  %55 = vmatprep.subr.bf16.mxu0 0
  %56 = vmatpush1.bf16.msra.mxu0 0
  %57 = vmatprep.subr.bf16.mxu0 0
  %58 = vmatpush1.bf16.msra.mxu0 0
  %59 = vmatprep.subr.bf16.mxu0 0
  %60 = vmatpush1.bf16.msra.mxu0 0
  %61 = vmatprep.subr.bf16.mxu0 0
  %62 = vmatpush1.bf16.msra.mxu0 0
  %63 = vmatprep.subr.bf16.mxu0 0
  %64 = vmatpush1.bf16.msra.mxu0 0
  %65 = vmatprep.subr.bf16.mxu0 0
  %66 = vmatpush1.bf16.msra.mxu0 0
  %67 = vmatprep.subr.bf16.mxu0 0
  %68 = vmatpush1.bf16.msra.mxu0 0
  %69 = vmatprep.subr.bf16.mxu0 0
  %70 = vmatpush1.bf16.msra.mxu0 0
  %71 = vmatprep.subr.bf16.mxu0 0
  %72 = vmatpush1.bf16.msra.mxu0 0
  %73 = vmatprep.subr.bf16.mxu0 0
  %74 = vmatpush1.bf16.msra.mxu0 0
  %75 = vmatprep.subr.bf16.mxu0 0
  %76 = vmatpush1.bf16.msra.mxu0 0
  %77 = vmatprep.subr.bf16.mxu0 0
  %78 = vmatpush1.bf16.msra.mxu0 0
  %79 = vmatprep.subr.bf16.mxu0 0
  %80 = vmatpush1.bf16.msra.mxu0 0
  %81 = vmatprep.subr.bf16.mxu0 0
  %82 = vmatpush1.bf16.msra.mxu0 0
  %83 = vmatprep.mubr.bf16.mxu0 0
  %84 = vmatmul.mubr.bf16.gmra.mrb[0].mxu0 %v49
  %v85 = vpop.f32.mrb[0].mxu0
  %v86 = vadd.f32 0.0, %v85
  %v87 = vpop.f32.mrb[0].mxu0
  %v88 = vpop.f32.mrb[0].mxu0
  %v89 = vadd.f32 0.0, %v88
  %v90 = vpop.f32.mrb[0].mxu0
  %91 = vdwg.mxu0
  %v92 = vadd.f32 %v22, %v86
  %v93 = vadd.f32 %v23, %v89
  %vm94 = vcmask 785408
  %95 = vst.msk [vmem:[#allocation2] sm:$0xff] %vm94, %v92
  %96 = vst.msk [vmem:[#allocation2 + $0x8] sm:$0xff] %vm94, %v93
  // Predicated region
  $region18: #{mha_forward_self.3} parent=0 // pred_check
    %p97 = pneg %p15
  $region19: #{mha_forward_self.3} parent=0 // pred_check_branch
    %99 = sbr.rel (%p97) target = $region21
  $region20: #{mha_forward_self.3} parent=0 // pred_region
    %v100 = vld [vmem:[#allocation2] sm:$0xff]
    %v101 = vld [vmem:[#allocation2 + $0x8] sm:$0xff]
    %v102 = vld [vmem:[%s2] sm:$0x1]
    %v104 = vlaneseq
    %v105 = vshrl.u32 %v104, 7
    %v106 = vsub.s32 0, %v105
    %v107 = vrot.slane %v102, %v106
    %v109 = vadd.f32 %v100, %v107
    %v110 = vadd.f32 %v101, %v107
    %v111 = vpack.c.bf16 %v110, %v109
    %v113 = vunpack.c.l.b16 %v111
    %v114 = vunpack.c.h.b16 %v111
    %v115 = vpack.c.b16 %v113, %v113
    %v116 = vpack.c.b16 %v114, %v114
    %vm119 = vcmask 781312
    %120 = vst.msk [vmem:[%s3] sm:$0xf] %vm119, %v115
    %121 = vst.msk [vmem:[%s3 + $0x4] sm:$0xf] %vm119, %v116
  $region21: #{mha_forward_self.3} parent=0 // pred_fallthru
    _
  // Predicated region
  $region22: #{mha_forward_self.3} parent=0 // pred_check
    _
  $region23: #{mha_forward_self.3} parent=0 // pred_check_branch
    %123 = sbr.rel (0) target = $region25
  $region24: #{mha_forward_self.3} parent=0 // pred_region
    _
  $region25: #{mha_forward_self.3} parent=0 // pred_fallthru
    _
  // Predicated region
  $region26: #{mha_forward_self.3} parent=0 // pred_check
    _
  $region27: #{mha_forward_self.3} parent=0 // pred_check_branch
    %125 = sbr.rel (0) target = $region29
  $region28: #{mha_forward_self.3} parent=0 // pred_region
    _
  $region29: #{mha_forward_self.3} parent=0 // pred_fallthru
    _

// kernel: mha_forward_self.5
$region0: #{mha_forward_self.5}
  #allocation0 [shape = 'u32[]', space=smem, size = 0x4, offset = 0x4, fixed_abs, tag = 'smem constant byte address 0x4 - core index']
  #allocation1 [shape = 'u32[144,128]{1,0:T(1,128)}', space=vmem, size = 0x12000, scoped, tag = 'internal scratch']
  #allocation2 [shape = 'f32[16,32]{1,0:T(8,128)}', space=vmem, size = 0x2000, scoped, tag = 'scratch operand']
  %s0 = inlined_call_operand.vmem [shape: bf16[16,32], index: 0, kind: input, shape index: {}]
  %s1 = inlined_call_operand.vmem [shape: bf16[32,32], index: 1, kind: input, shape index: {}]
  %s2 = inlined_call_operand.vmem [shape: f32[1,32], index: 2, kind: input, shape index: {}]
  %s3 = inlined_call_operand.hbm [shape: f32[16,32], index: 3, kind: output, shape index: {}]
  %s4 = sld [smem:[#allocation0]]
  $region30: #{mha_forward_self.5} parent=0
    _
  %s6 = ssub.s32 1, %s4
  %s7 = scalar_select 0, %s6, %s4
  $region1: #{mha_forward_self.5} parent=0
    #allocation3 [shape = 'u8[8192]{0}', space=vmem, size = 0x2000, scoped, tag = 'output window, operand 0, single buffered']
    #allocation4 [shape = 's32[1]{0}', space=sflag, size = 0x4, scoped, tag = 'scoped memory for mha_forward_self.5']
    %8 = vsyncpa [#allocation4], 0
    // Predicated region
    $region2: #{mha_forward_self.5} parent=1 // pred_check
      _
    $region3: #{mha_forward_self.5} parent=1 // pred_check_branch
      %10 = sbr.rel (0) target = $region5
    $region4: #{mha_forward_self.5} parent=1 // pred_region
      _
    $region5: #{mha_forward_self.5} parent=1 // pred_fallthru
      _
    // Predicated region
    $region6: #{mha_forward_self.5} parent=1 // pred_check
      _
    $region7: #{mha_forward_self.5} parent=1 // pred_check_branch
      %12 = sbr.rel (0) target = $region9
    $region8: #{mha_forward_self.5} parent=1 // pred_region
      _
    $region9: #{mha_forward_self.5} parent=1 // pred_fallthru
      _
    // Predicated region
    $region10: #{mha_forward_self.5} parent=1 // pred_check
      _
    $region11: #{mha_forward_self.5} parent=1 // pred_check_branch
      %14 = sbr.rel (0) target = $region13
    $region12: #{mha_forward_self.5} parent=1 // pred_region
      _
    $region13: #{mha_forward_self.5} parent=1 // pred_fallthru
      _
    %p16 = scmp.eq.s32.totalorder 0, 0
    // Predicated region
    $region14: #{mha_forward_self.5} parent=1 // pred_check
      %p17 = pneg %p16
    $region15: #{mha_forward_self.5} parent=1 // pred_check_branch
      %19 = sbr.rel (%p17) target = $region17
    $region16: #{mha_forward_self.5} parent=1 // pred_region
      %vm20 = vcmask 261120
      %21 = vst.msk [vmem:[#allocation2] sm:$0xff] %vm20, 0.0
      %22 = vst.msk [vmem:[#allocation2 + $0x8] sm:$0xff] %vm20, 0.0
    $region17: #{mha_forward_self.5} parent=1 // pred_fallthru
      _
    %v23 = vld [vmem:[#allocation2] sm:$0xff]
    %v24 = vld [vmem:[#allocation2 + $0x8] sm:$0xff]
    %v25 = vld [vmem:[%s0] sm:$0xf]
    %v26 = vld [vmem:[%s0 + $0x4] sm:$0xf]
    %v27 = vld [vmem:[%s1] sm:$0xf]
    %v28 = vld [vmem:[%s1 + $0x4] sm:$0xf]
    %v29 = vld [vmem:[%s1 + $0x8] sm:$0xf]
    %v30 = vld [vmem:[%s1 + $0xc] sm:$0xf]
    %v33 = vunpack.c.l.b16 %v25
    %v34 = vunpack.c.l.b16 %v26
    %v35 = vpack.c.b16 %v34, %v33
    %v40 = vunpack.c.l.b16 %v27
    %v41 = vunpack.c.l.b16 %v28
    %v42 = vunpack.c.l.b16 %v29
    %v43 = vunpack.c.l.b16 %v30
    %v44 = vpack.c.b16 %v41, %v40
    %v45 = vpack.c.b16 %v43, %v42
    %vm48 = vcmask 261120
    %v50 = vsel %vm48, %v35, 0
    %52 = vmatprep.subr.bf16.mxu0 0
    %53 = vmatpush1.bf16.msra.mxu0 %v44
    %54 = vmatprep.subr.bf16.mxu0 0
    %55 = vmatpush1.bf16.msra.mxu0 %v45
    %56 = vmatprep.subr.bf16.mxu0 0
    %57 = vmatpush1.bf16.msra.mxu0 0
    %58 = vmatprep.subr.bf16.mxu0 0
    %59 = vmatpush1.bf16.msra.mxu0 0
    %60 = vmatprep.subr.bf16.mxu0 0
    %61 = vmatpush1.bf16.msra.mxu0 0
    %62 = vmatprep.subr.bf16.mxu0 0
    %63 = vmatpush1.bf16.msra.mxu0 0
    %64 = vmatprep.subr.bf16.mxu0 0
    %65 = vmatpush1.bf16.msra.mxu0 0
    %66 = vmatprep.subr.bf16.mxu0 0
    %67 = vmatpush1.bf16.msra.mxu0 0
    %68 = vmatprep.subr.bf16.mxu0 0
    %69 = vmatpush1.bf16.msra.mxu0 0
    %70 = vmatprep.subr.bf16.mxu0 0
    %71 = vmatpush1.bf16.msra.mxu0 0
    %72 = vmatprep.subr.bf16.mxu0 0
    %73 = vmatpush1.bf16.msra.mxu0 0
    %74 = vmatprep.subr.bf16.mxu0 0
    %75 = vmatpush1.bf16.msra.mxu0 0
    %76 = vmatprep.subr.bf16.mxu0 0
    %77 = vmatpush1.bf16.msra.mxu0 0
    %78 = vmatprep.subr.bf16.mxu0 0
    %79 = vmatpush1.bf16.msra.mxu0 0
    %80 = vmatprep.subr.bf16.mxu0 0
    %81 = vmatpush1.bf16.msra.mxu0 0
    %82 = vmatprep.subr.bf16.mxu0 0
    %83 = vmatpush1.bf16.msra.mxu0 0
    %84 = vmatprep.mubr.bf16.mxu0 0
    %85 = vmatmul.mubr.bf16.gmra.mrb[0].mxu0 %v50
    %v86 = vpop.f32.mrb[0].mxu0
    %v87 = vadd.f32 0.0, %v86
    %v88 = vpop.f32.mrb[0].mxu0
    %v89 = vpop.f32.mrb[0].mxu0
    %v90 = vadd.f32 0.0, %v89
    %v91 = vpop.f32.mrb[0].mxu0
    %92 = vdwg.mxu0
    %v93 = vadd.f32 %v23, %v87
    %v94 = vadd.f32 %v24, %v90
    %95 = vst.msk [vmem:[#allocation2] sm:$0xff] %vm48, %v93
    %96 = vst.msk [vmem:[#allocation2 + $0x8] sm:$0xff] %vm48, %v94
    // Predicated region
    $region18: #{mha_forward_self.5} parent=1 // pred_check
      %p97 = pneg %p16
    $region19: #{mha_forward_self.5} parent=1 // pred_check_branch
      %99 = sbr.rel (%p97) target = $region21
    $region20: #{mha_forward_self.5} parent=1 // pred_region
      %v100 = vld [vmem:[#allocation2] sm:$0xff]
      %v101 = vld [vmem:[#allocation2 + $0x8] sm:$0xff]
      %v102 = vld [vmem:[%s2] sm:$0x1]
      %v104 = vlaneseq
      %v105 = vshrl.u32 %v104, 7
      %v106 = vsub.s32 0, %v105
      %v107 = vrot.slane %v102, %v106
      %v109 = vadd.f32 %v100, %v107
      %v110 = vadd.f32 %v101, %v107
      %111 = vst.msk [vmem:[#allocation3] sm:$0xff] %vm48, %v109
      %112 = vst.msk [vmem:[#allocation3 + $0x8] sm:$0xff] %vm48, %v110
    $region21: #{mha_forward_self.5} parent=1 // pred_fallthru
      _
    // Predicated region
    $region22: #{mha_forward_self.5} parent=1 // pred_check
      _
    $region23: #{mha_forward_self.5} parent=1 // pred_check_branch
      %114 = sbr.rel (0) target = $region25
    $region24: #{mha_forward_self.5} parent=1 // pred_region
      %s116 = ssub.s32 256, 256
      %117 = vsyncadd [#allocation4], %s116
      %s118 = sshll.u32 [#allocation3], 4
      %s119 = int_to_ptr.vmem [resolvable:$true] %s118
      %124 = dma.vmem_to_hbm [thread:$0]  %s119, 256, %s3, [#allocation4], 128, 128, 8
    $region25: #{mha_forward_self.5} parent=1 // pred_fallthru
      _
    // Predicated region
    $region26: #{mha_forward_self.5} parent=1 // pred_check
      _
    $region27: #{mha_forward_self.5} parent=1 // pred_check_branch
      %126 = sbr.rel (0) target = $region29
    $region28: #{mha_forward_self.5} parent=1 // pred_region
      %127 = dma.done [#allocation4], 256
    $region29: #{mha_forward_self.5} parent=1 // pred_fallthru
      _
    %128 = vsyncpa [#allocation4], 1

// kernel: mha_forward_self.4
$region0: #{mha_forward_self.4}
  #allocation0 [shape = 'u32[]', space=smem, size = 0x4, offset = 0x4, fixed_abs, tag = 'smem constant byte address 0x4 - core index']
  #allocation1 [shape = 'u32[144,128]{1,0:T(1,128)}', space=vmem, size = 0x12000, scoped, tag = 'internal scratch']
  #allocation2 [shape = 'f32[4,8,1]{2,1,0:T(8,128)}', space=vmem, size = 0x4000, scoped, tag = 'scratch operand']
  #allocation3 [shape = 'f32[4,8,1]{2,1,0:T(8,128)}', space=vmem, size = 0x4000, scoped, tag = 'scratch operand']
  #allocation4 [shape = 'f32[4,8,8]{2,1,0:T(8,128)}', space=vmem, size = 0x4000, scoped, tag = 'scratch operand']
  %s0 = inlined_call_operand.vmem [shape: bf16[2,8,3,4,8], index: 0, kind: input, shape index: {}, may-alias: {0,1,2}]
  %s1 = inlined_call_operand.vmem [shape: bf16[2,8,3,4,8], index: 1, kind: input, shape index: {}, may-alias: {0,1,2}]
  %s2 = inlined_call_operand.vmem [shape: bf16[2,8,3,4,8], index: 2, kind: input, shape index: {}, may-alias: {0,1,2}]
  %s3 = inlined_call_operand.vmem [shape: bf16[2,8,32], index: 3, kind: output, shape index: {}]
  %s4 = sld [smem:[#allocation0]]
  $region176: #{mha_forward_self.4} parent=0
    _
  %s6 = ssub.s32 1, %s4
  %s7 = scalar_select 0, %s6, %s4
  $region1: #{mha_forward_self.4} parent=0
    #allocation5 [shape = 'u8[16384]{0}', space=vmem, size = 0x4000, scoped, tag = 'input window, operand 0']
    #allocation6 [shape = 'u8[16384]{0}', space=vmem, size = 0x4000, scoped, tag = 'input window, operand 1']
    #allocation7 [shape = 'u8[16384]{0}', space=vmem, size = 0x4000, scoped, tag = 'input window, operand 2']
    loop: start=0, step=1, limit=4
    $region2: #{mha_forward_self.4} parent=1 // loop_pre_header
      _
    $region3: #{mha_forward_self.4} parent=1 // loop_header
      %s9 = sphi 0, %s13
      %p10 = scmp.ge.s32.totalorder %s9, 4
      %s16 = sphi 0, %s35
      %s17 = sphi 0, %s31
      %s18 = sphi 0, %s27
      %s19 = sphi 0, %s16
      %s20 = sphi 0, %s17
      %s21 = sphi 0, %s18
      %s22 = sphi 0, %s19
      %s23 = sphi 0, %s20
      %s24 = sphi 0, %s21
      %s40 = sphi 0, %s42
      %s43 = sphi 0, %s40
      %s44 = sphi 0, %s43
      %s60 = sphi 0, %s44
      %s68 = sphi 0, %s70
      %s71 = sphi 0, %s68
      %s72 = sphi 0, %s71
      %s88 = sphi 0, %s72
      %s96 = sphi 0, %s98
      %s99 = sphi 0, %s96
      %s100 = sphi 0, %s99
      %s116 = sphi 0, %s100
      %s124 = sphi 0, %s126
      %s127 = sphi 0, %s124
      %s128 = sphi 0, %s127
      %s144 = sphi 0, %s128
    $region4: #{mha_forward_self.4} parent=1 // loop_header_branch
      %12 = sbr.rel (%p10) target = $region8
    $region5: #{mha_forward_self.4} parent=1 // loop_body
      %s14 = ssub.s32 %s9, 1
      %s15 = ssub.s32 %s9, 2
      %s25 = sadd.s32 1, %s18
      %p26 = scmp.ge.s32.totalorder %s25, 1
      %s27 = scalar_select %p26, 0, %s25
      %s28 = sadd.s32 1, %s17
      %s29 = scalar_select %p26, %s28, %s17
      %p30 = scmp.ge.s32.totalorder %s29, 1
      %s31 = scalar_select %p30, 0, %s29
      %s32 = sadd.s32 1, %s16
      %s33 = scalar_select %p30, %s32, %s16
      %p34 = scmp.ge.s32.totalorder %s33, 2
      %s35 = scalar_select %p34, 0, %s33
      %s36 = ssub.s32 %s16, %s35
      %s37 = ssub.s32 %s17, %s31
      %s38 = sor.u32 %s36, %s37
      %p39 = scmp.eq.s32.totalorder %s38, 0
      %s41 = sadd.s32 %s40, 1
      %s42 = scalar_select %p39, %s40, %s41
      %p45 = pneg %p39
      %p46 = scmp.eq.s32.totalorder %s9, 1
      %p47 = por %p45, %p46
      %p48 = scmp.ne.s32.totalorder %s40, %s43
      %p49 = scmp.eq.s32.totalorder %s9, 0
      %p50 = por %p48, %p49
      %p51 = scmp.ne.s32.totalorder %s40, %s43
      %p52 = scmp.eq.s32.totalorder %s14, 1
      %p53 = por %p51, %p52
      %p54 = scmp.ne.s32.totalorder %s43, %s44
      %p55 = scmp.eq.s32.totalorder %s14, 0
      %p56 = por %p54, %p55
      %p57 = scmp.ne.s32.totalorder %s43, %s44
      %p58 = scmp.eq.s32.totalorder %s15, 1
      %p59 = por %p57, %p58
      %p61 = scmp.ne.s32.totalorder %s44, %s60
      %p62 = scmp.eq.s32.totalorder %s15, 0
      %p63 = por %p61, %p62
      %s64 = ssub.s32 %s16, %s35
      %s65 = ssub.s32 %s18, %s27
      %s66 = sor.u32 %s64, %s65
      %p67 = scmp.eq.s32.totalorder %s66, 0
      %s69 = sadd.s32 %s68, 1
      %s70 = scalar_select %p67, %s68, %s69
      %p73 = pneg %p67
      %p74 = scmp.eq.s32.totalorder %s9, 1
      %p75 = por %p73, %p74
      %p76 = scmp.ne.s32.totalorder %s68, %s71
      %p77 = scmp.eq.s32.totalorder %s9, 0
      %p78 = por %p76, %p77
      %p79 = scmp.ne.s32.totalorder %s68, %s71
      %p80 = scmp.eq.s32.totalorder %s14, 1
      %p81 = por %p79, %p80
      %p82 = scmp.ne.s32.totalorder %s71, %s72
      %p83 = scmp.eq.s32.totalorder %s14, 0
      %p84 = por %p82, %p83
      %p85 = scmp.ne.s32.totalorder %s71, %s72
      %p86 = scmp.eq.s32.totalorder %s15, 1
      %p87 = por %p85, %p86
      %p89 = scmp.ne.s32.totalorder %s72, %s88
      %p90 = scmp.eq.s32.totalorder %s15, 0
      %p91 = por %p89, %p90
      %s92 = ssub.s32 %s16, %s35
      %s93 = ssub.s32 %s18, %s27
      %s94 = sor.u32 %s92, %s93
      %p95 = scmp.eq.s32.totalorder %s94, 0
      %s97 = sadd.s32 %s96, 1
      %s98 = scalar_select %p95, %s96, %s97
      %p101 = pneg %p95
      %p102 = scmp.eq.s32.totalorder %s9, 1
      %p103 = por %p101, %p102
      %p104 = scmp.ne.s32.totalorder %s96, %s99
      %p105 = scmp.eq.s32.totalorder %s9, 0
      %p106 = por %p104, %p105
      %p107 = scmp.ne.s32.totalorder %s96, %s99
      %p108 = scmp.eq.s32.totalorder %s14, 1
      %p109 = por %p107, %p108
      %p110 = scmp.ne.s32.totalorder %s99, %s100
      %p111 = scmp.eq.s32.totalorder %s14, 0
      %p112 = por %p110, %p111
      %p113 = scmp.ne.s32.totalorder %s99, %s100
      %p114 = scmp.eq.s32.totalorder %s15, 1
      %p115 = por %p113, %p114
      %p117 = scmp.ne.s32.totalorder %s100, %s116
      %p118 = scmp.eq.s32.totalorder %s15, 0
      %p119 = por %p117, %p118
      %s120 = ssub.s32 %s16, %s35
      %s121 = ssub.s32 %s17, %s31
      %s122 = sor.u32 %s120, %s121
      %p123 = scmp.eq.s32.totalorder %s122, 0
      %s125 = sadd.s32 %s124, 1
      %s126 = scalar_select %p123, %s124, %s125
      %p129 = pneg %p123
      %p130 = scmp.eq.s32.totalorder %s9, 1
      %p131 = por %p129, %p130
      %p132 = scmp.ne.s32.totalorder %s124, %s127
      %p133 = scmp.eq.s32.totalorder %s9, 0
      %p134 = por %p132, %p133
      %p135 = scmp.ne.s32.totalorder %s124, %s127
      %p136 = scmp.eq.s32.totalorder %s14, 1
      %p137 = por %p135, %p136
      %p138 = scmp.ne.s32.totalorder %s127, %s128
      %p139 = scmp.eq.s32.totalorder %s14, 0
      %p140 = por %p138, %p139
      %p141 = scmp.ne.s32.totalorder %s127, %s128
      %p142 = scmp.eq.s32.totalorder %s15, 1
      %p143 = por %p141, %p142
      %p145 = scmp.ne.s32.totalorder %s128, %s144
      %p146 = scmp.eq.s32.totalorder %s15, 0
      %p147 = por %p145, %p146
      %p148 = scmp.le.s32.totalorder 1, %s9
      %p149 = scmp.lt.s32.totalorder %s9, 3
      %p150 = pnand %p148, %p149
      %p151 = pneg %p150
      // Predicated region
      $region9: #{mha_forward_self.4} parent=5 // pred_check
        _
      $region10: #{mha_forward_self.4} parent=5 // pred_check_branch
        %153 = sbr.rel (%p150) target = $region12
      $region11: #{mha_forward_self.4} parent=5 // pred_region
        %s154 = ssub.s32 %s9, 1
      $region12: #{mha_forward_self.4} parent=5 // pred_fallthru
        _
      %p155 = scmp.lt.s32.totalorder %s9, 2
      // Predicated region
      $region13: #{mha_forward_self.4} parent=5 // pred_check
        %p156 = pneg %p155
      $region14: #{mha_forward_self.4} parent=5 // pred_check_branch
        %158 = sbr.rel (%p156) target = $region16
      $region15: #{mha_forward_self.4} parent=5 // pred_region
        // Predicated region
        $region17: #{mha_forward_self.4} parent=15 // pred_check
          %p159 = pneg %p50
        $region18: #{mha_forward_self.4} parent=15 // pred_check_branch
          %161 = sbr.rel (%p159) target = $region20
        $region19: #{mha_forward_self.4} parent=15 // pred_region
          %s162 = sand.u32 %s40, 1
          %s163 = sand.u32 %s40, 1
          %s164 = smul.addr %s163, 16
          %s165 = scalar_lea.vmem [#allocation5], %s164
          %s166 = smul.u32 8, %s17
          %s167 = smul.addr %s166, 3
          %s168 = smul.addr %s16, 24
          %s169 = sadd.s32 %s167, %s168
          %s170 = smul.addr %s169, 2
          %s171 = scalar_lea.vmem %s0, %s170
          // Predicated region
          $region21: #{mha_forward_self.4} parent=19 // pred_check
            _
          $region22: #{mha_forward_self.4} parent=19 // pred_check_branch
            %173 = sbr.rel (0) target = $region24
          $region23: #{mha_forward_self.4} parent=19 // pred_region
            // Predicated region
            $region25: #{mha_forward_self.4} parent=23 // pred_check
              _
            $region26: #{mha_forward_self.4} parent=23 // pred_check_branch
              %175 = sbr.rel target = $region28
            $region27: #{mha_forward_self.4} parent=23 // pred_region
              // Predicated region
              $region40: #{mha_forward_self.4} parent=27 // pred_check
                _
              $region41: #{mha_forward_self.4} parent=27 // pred_check_branch
                %204 = sbr.rel (0) target = $region43
              $region42: #{mha_forward_self.4} parent=27 // pred_region
                loop: start=0, step=1, limit=1
                $region44: #{mha_forward_self.4} parent=42 // loop_pre_header
                  _
                $region45: #{mha_forward_self.4} parent=42 // loop_header
                  %s206 = sphi 0, %s210
                  %p207 = scmp.ge.s32.totalorder %s206, 1
                  %s211 = sphi %s171, %s171
                  %s212 = sphi %s165, %s165
                $region46: #{mha_forward_self.4} parent=42 // loop_header_branch
                  %209 = sbr.rel (%p207) target = $region50
                $region47: #{mha_forward_self.4} parent=42 // loop_body
                  _
                $region48: #{mha_forward_self.4} parent=42 // loop_footer
                  %s210 = sadd.s32 1, %s206
                $region49: #{mha_forward_self.4} parent=42 // loop_footer_branch
                  %205 = sbr.rel target = $region45
                $region50: #{mha_forward_self.4} parent=42 // loop_exit
                  _
                loop: start=0, step=1, limit=1
                $region51: #{mha_forward_self.4} parent=42 // loop_pre_header
                  _
                $region52: #{mha_forward_self.4} parent=42 // loop_header
                  %s215 = sphi 0, %s219
                  %p216 = scmp.ge.s32.totalorder %s215, 1
                  %s220 = sphi %s171, %s171
                  %s221 = sphi %s165, %s165
                $region53: #{mha_forward_self.4} parent=42 // loop_header_branch
                  %218 = sbr.rel (%p216) target = $region57
                $region54: #{mha_forward_self.4} parent=42 // loop_body
                  %v222 = vld [vmem:[%s220] sm:$0x3]
                  %223 = vst [vmem:[%s221] sm:$0x3] %v222
                  %v224 = vld [vmem:[%s220 + $0x6] sm:$0x3]
                  %225 = vst [vmem:[%s221 + $0x2] sm:$0x3] %v224
                  %v226 = vld [vmem:[%s220 + $0xc] sm:$0x3]
                  %227 = vst [vmem:[%s221 + $0x4] sm:$0x3] %v226
                  %v228 = vld [vmem:[%s220 + $0x12] sm:$0x3]
                  %229 = vst [vmem:[%s221 + $0x6] sm:$0x3] %v228
                  %v230 = vld [vmem:[%s220 + $0x18] sm:$0x3]
                  %231 = vst [vmem:[%s221 + $0x8] sm:$0x3] %v230
                  %v232 = vld [vmem:[%s220 + $0x1e] sm:$0x3]
                  %233 = vst [vmem:[%s221 + $0xa] sm:$0x3] %v232
                  %v234 = vld [vmem:[%s220 + $0x24] sm:$0x3]
                  %235 = vst [vmem:[%s221 + $0xc] sm:$0x3] %v234
                  %v236 = vld [vmem:[%s220 + $0x2a] sm:$0x3]
                  %237 = vst [vmem:[%s221 + $0xe] sm:$0x3] %v236
                $region55: #{mha_forward_self.4} parent=42 // loop_footer
                  %s219 = sadd.s32 1, %s215
                $region56: #{mha_forward_self.4} parent=42 // loop_footer_branch
                  %214 = sbr.rel target = $region52
                $region57: #{mha_forward_self.4} parent=42 // loop_exit
                  _
              $region43: #{mha_forward_self.4} parent=27 // pred_fallthru
                _
            $region28: #{mha_forward_self.4} parent=23 // pred_fallthru
              _
            // Predicated region
            $region29: #{mha_forward_self.4} parent=23 // pred_check
              _
            $region30: #{mha_forward_self.4} parent=23 // pred_check_branch
              %177 = sbr.rel (0) target = $region32
            $region31: #{mha_forward_self.4} parent=23 // pred_region
              loop: start=0, step=1, limit=1
              $region33: #{mha_forward_self.4} parent=31 // loop_pre_header
                _
              $region34: #{mha_forward_self.4} parent=31 // loop_header
                %s180 = sphi 0, %s184
                %p181 = scmp.ge.s32.totalorder %s180, 1
                %s185 = sphi %s171, %s171
                %s186 = sphi %s165, %s165
              $region35: #{mha_forward_self.4} parent=31 // loop_header_branch
                %183 = sbr.rel (%p181) target = $region39
              $region36: #{mha_forward_self.4} parent=31 // loop_body
                %v187 = vld [vmem:[%s185] sm:$0x3]
                %188 = vst [vmem:[%s186] sm:$0x3] %v187
                %v189 = vld [vmem:[%s185 + $0x6] sm:$0x3]
                %190 = vst [vmem:[%s186 + $0x2] sm:$0x3] %v189
                %v191 = vld [vmem:[%s185 + $0xc] sm:$0x3]
                %192 = vst [vmem:[%s186 + $0x4] sm:$0x3] %v191
                %v193 = vld [vmem:[%s185 + $0x12] sm:$0x3]
                %194 = vst [vmem:[%s186 + $0x6] sm:$0x3] %v193
                %v195 = vld [vmem:[%s185 + $0x18] sm:$0x3]
                %196 = vst [vmem:[%s186 + $0x8] sm:$0x3] %v195
                %v197 = vld [vmem:[%s185 + $0x1e] sm:$0x3]
                %198 = vst [vmem:[%s186 + $0xa] sm:$0x3] %v197
                %v199 = vld [vmem:[%s185 + $0x24] sm:$0x3]
                %200 = vst [vmem:[%s186 + $0xc] sm:$0x3] %v199
                %v201 = vld [vmem:[%s185 + $0x2a] sm:$0x3]
                %202 = vst [vmem:[%s186 + $0xe] sm:$0x3] %v201
              $region37: #{mha_forward_self.4} parent=31 // loop_footer
                %s184 = sadd.s32 1, %s180
              $region38: #{mha_forward_self.4} parent=31 // loop_footer_branch
                %179 = sbr.rel target = $region34
              $region39: #{mha_forward_self.4} parent=31 // loop_exit
                _
            $region32: #{mha_forward_self.4} parent=23 // pred_fallthru
              _
          $region24: #{mha_forward_self.4} parent=19 // pred_fallthru
            _
          %238 = vnop
        $region20: #{mha_forward_self.4} parent=15 // pred_fallthru
          _
        // Predicated region
        $region58: #{mha_forward_self.4} parent=15 // pred_check
          %p239 = pneg %p78
        $region59: #{mha_forward_self.4} parent=15 // pred_check_branch
          %241 = sbr.rel (%p239) target = $region61
        $region60: #{mha_forward_self.4} parent=15 // pred_region
          %s242 = sand.u32 %s68, 1
          %s243 = sand.u32 %s68, 1
          %s244 = smul.addr %s243, 16
          %s245 = scalar_lea.vmem [#allocation6], %s244
          %s246 = smul.u32 8, %s18
          %s247 = smul.addr %s246, 3
          %s248 = sadd.s32 1, %s247
          %s249 = smul.addr %s16, 24
          %s250 = sadd.s32 %s248, %s249
          %s251 = smul.addr %s250, 2
          %s252 = scalar_lea.vmem %s1, %s251
          // Predicated region
          $region62: #{mha_forward_self.4} parent=60 // pred_check
            _
          $region63: #{mha_forward_self.4} parent=60 // pred_check_branch
            %254 = sbr.rel (0) target = $region65
          $region64: #{mha_forward_self.4} parent=60 // pred_region
            // Predicated region
            $region66: #{mha_forward_self.4} parent=64 // pred_check
              _
            $region67: #{mha_forward_self.4} parent=64 // pred_check_branch
              %256 = sbr.rel target = $region69
            $region68: #{mha_forward_self.4} parent=64 // pred_region
              // Predicated region
              $region81: #{mha_forward_self.4} parent=68 // pred_check
                _
              $region82: #{mha_forward_self.4} parent=68 // pred_check_branch
                %285 = sbr.rel (0) target = $region84
              $region83: #{mha_forward_self.4} parent=68 // pred_region
                loop: start=0, step=1, limit=1
                $region85: #{mha_forward_self.4} parent=83 // loop_pre_header
                  _
                $region86: #{mha_forward_self.4} parent=83 // loop_header
                  %s287 = sphi 0, %s291
                  %p288 = scmp.ge.s32.totalorder %s287, 1
                  %s292 = sphi %s252, %s252
                  %s293 = sphi %s245, %s245
                $region87: #{mha_forward_self.4} parent=83 // loop_header_branch
                  %290 = sbr.rel (%p288) target = $region91
                $region88: #{mha_forward_self.4} parent=83 // loop_body
                  _
                $region89: #{mha_forward_self.4} parent=83 // loop_footer
                  %s291 = sadd.s32 1, %s287
                $region90: #{mha_forward_self.4} parent=83 // loop_footer_branch
                  %286 = sbr.rel target = $region86
                $region91: #{mha_forward_self.4} parent=83 // loop_exit
                  _
                loop: start=0, step=1, limit=1
                $region92: #{mha_forward_self.4} parent=83 // loop_pre_header
                  _
                $region93: #{mha_forward_self.4} parent=83 // loop_header
                  %s296 = sphi 0, %s300
                  %p297 = scmp.ge.s32.totalorder %s296, 1
                  %s301 = sphi %s252, %s252
                  %s302 = sphi %s245, %s245
                $region94: #{mha_forward_self.4} parent=83 // loop_header_branch
                  %299 = sbr.rel (%p297) target = $region98
                $region95: #{mha_forward_self.4} parent=83 // loop_body
                  %v303 = vld [vmem:[%s301] sm:$0x3]
                  %304 = vst [vmem:[%s302] sm:$0x3] %v303
                  %v305 = vld [vmem:[%s301 + $0x6] sm:$0x3]
                  %306 = vst [vmem:[%s302 + $0x2] sm:$0x3] %v305
                  %v307 = vld [vmem:[%s301 + $0xc] sm:$0x3]
                  %308 = vst [vmem:[%s302 + $0x4] sm:$0x3] %v307
                  %v309 = vld [vmem:[%s301 + $0x12] sm:$0x3]
                  %310 = vst [vmem:[%s302 + $0x6] sm:$0x3] %v309
                  %v311 = vld [vmem:[%s301 + $0x18] sm:$0x3]
                  %312 = vst [vmem:[%s302 + $0x8] sm:$0x3] %v311
                  %v313 = vld [vmem:[%s301 + $0x1e] sm:$0x3]
                  %314 = vst [vmem:[%s302 + $0xa] sm:$0x3] %v313
                  %v315 = vld [vmem:[%s301 + $0x24] sm:$0x3]
                  %316 = vst [vmem:[%s302 + $0xc] sm:$0x3] %v315
                  %v317 = vld [vmem:[%s301 + $0x2a] sm:$0x3]
                  %318 = vst [vmem:[%s302 + $0xe] sm:$0x3] %v317
                $region96: #{mha_forward_self.4} parent=83 // loop_footer
                  %s300 = sadd.s32 1, %s296
                $region97: #{mha_forward_self.4} parent=83 // loop_footer_branch
                  %295 = sbr.rel target = $region93
                $region98: #{mha_forward_self.4} parent=83 // loop_exit
                  _
              $region84: #{mha_forward_self.4} parent=68 // pred_fallthru
                _
            $region69: #{mha_forward_self.4} parent=64 // pred_fallthru
              _
            // Predicated region
            $region70: #{mha_forward_self.4} parent=64 // pred_check
              _
            $region71: #{mha_forward_self.4} parent=64 // pred_check_branch
              %258 = sbr.rel (0) target = $region73
            $region72: #{mha_forward_self.4} parent=64 // pred_region
              loop: start=0, step=1, limit=1
              $region74: #{mha_forward_self.4} parent=72 // loop_pre_header
                _
              $region75: #{mha_forward_self.4} parent=72 // loop_header
                %s261 = sphi 0, %s265
                %p262 = scmp.ge.s32.totalorder %s261, 1
                %s266 = sphi %s252, %s252
                %s267 = sphi %s245, %s245
              $region76: #{mha_forward_self.4} parent=72 // loop_header_branch
                %264 = sbr.rel (%p262) target = $region80
              $region77: #{mha_forward_self.4} parent=72 // loop_body
                %v268 = vld [vmem:[%s266] sm:$0x3]
                %269 = vst [vmem:[%s267] sm:$0x3] %v268
                %v270 = vld [vmem:[%s266 + $0x6] sm:$0x3]
                %271 = vst [vmem:[%s267 + $0x2] sm:$0x3] %v270
                %v272 = vld [vmem:[%s266 + $0xc] sm:$0x3]
                %273 = vst [vmem:[%s267 + $0x4] sm:$0x3] %v272
                %v274 = vld [vmem:[%s266 + $0x12] sm:$0x3]
                %275 = vst [vmem:[%s267 + $0x6] sm:$0x3] %v274
                %v276 = vld [vmem:[%s266 + $0x18] sm:$0x3]
                %277 = vst [vmem:[%s267 + $0x8] sm:$0x3] %v276
                %v278 = vld [vmem:[%s266 + $0x1e] sm:$0x3]
                %279 = vst [vmem:[%s267 + $0xa] sm:$0x3] %v278
                %v280 = vld [vmem:[%s266 + $0x24] sm:$0x3]
                %281 = vst [vmem:[%s267 + $0xc] sm:$0x3] %v280
                %v282 = vld [vmem:[%s266 + $0x2a] sm:$0x3]
                %283 = vst [vmem:[%s267 + $0xe] sm:$0x3] %v282
              $region78: #{mha_forward_self.4} parent=72 // loop_footer
                %s265 = sadd.s32 1, %s261
              $region79: #{mha_forward_self.4} parent=72 // loop_footer_branch
                %260 = sbr.rel target = $region75
              $region80: #{mha_forward_self.4} parent=72 // loop_exit
                _
            $region73: #{mha_forward_self.4} parent=64 // pred_fallthru
              _
          $region65: #{mha_forward_self.4} parent=60 // pred_fallthru
            _
          %319 = vnop
        $region61: #{mha_forward_self.4} parent=15 // pred_fallthru
          _
        // Predicated region
        $region99: #{mha_forward_self.4} parent=15 // pred_check
          %p320 = pneg %p106
        $region100: #{mha_forward_self.4} parent=15 // pred_check_branch
          %322 = sbr.rel (%p320) target = $region102
        $region101: #{mha_forward_self.4} parent=15 // pred_region
          %s323 = sand.u32 %s96, 1
          %s324 = sand.u32 %s96, 1
          %s325 = smul.addr %s324, 16
          %s326 = scalar_lea.vmem [#allocation7], %s325
          %s327 = smul.u32 8, %s18
          %s328 = smul.addr %s327, 3
          %s329 = sadd.s32 2, %s328
          %s330 = smul.addr %s16, 24
          %s331 = sadd.s32 %s329, %s330
          %s332 = smul.addr %s331, 2
          %s333 = scalar_lea.vmem %s2, %s332
          // Predicated region
          $region103: #{mha_forward_self.4} parent=101 // pred_check
            _
          $region104: #{mha_forward_self.4} parent=101 // pred_check_branch
            %335 = sbr.rel (0) target = $region106
          $region105: #{mha_forward_self.4} parent=101 // pred_region
            // Predicated region
            $region107: #{mha_forward_self.4} parent=105 // pred_check
              _
            $region108: #{mha_forward_self.4} parent=105 // pred_check_branch
              %337 = sbr.rel target = $region110
            $region109: #{mha_forward_self.4} parent=105 // pred_region
              // Predicated region
              $region122: #{mha_forward_self.4} parent=109 // pred_check
                _
              $region123: #{mha_forward_self.4} parent=109 // pred_check_branch
                %366 = sbr.rel (0) target = $region125
              $region124: #{mha_forward_self.4} parent=109 // pred_region
                loop: start=0, step=1, limit=1
                $region126: #{mha_forward_self.4} parent=124 // loop_pre_header
                  _
                $region127: #{mha_forward_self.4} parent=124 // loop_header
                  %s368 = sphi 0, %s372
                  %p369 = scmp.ge.s32.totalorder %s368, 1
                  %s373 = sphi %s333, %s333
                  %s374 = sphi %s326, %s326
                $region128: #{mha_forward_self.4} parent=124 // loop_header_branch
                  %371 = sbr.rel (%p369) target = $region132
                $region129: #{mha_forward_self.4} parent=124 // loop_body
                  _
                $region130: #{mha_forward_self.4} parent=124 // loop_footer
                  %s372 = sadd.s32 1, %s368
                $region131: #{mha_forward_self.4} parent=124 // loop_footer_branch
                  %367 = sbr.rel target = $region127
                $region132: #{mha_forward_self.4} parent=124 // loop_exit
                  _
                loop: start=0, step=1, limit=1
                $region133: #{mha_forward_self.4} parent=124 // loop_pre_header
                  _
                $region134: #{mha_forward_self.4} parent=124 // loop_header
                  %s377 = sphi 0, %s381
                  %p378 = scmp.ge.s32.totalorder %s377, 1
                  %s382 = sphi %s333, %s333
                  %s383 = sphi %s326, %s326
                $region135: #{mha_forward_self.4} parent=124 // loop_header_branch
                  %380 = sbr.rel (%p378) target = $region139
                $region136: #{mha_forward_self.4} parent=124 // loop_body
                  %v384 = vld [vmem:[%s382] sm:$0x3]
                  %385 = vst [vmem:[%s383] sm:$0x3] %v384
                  %v386 = vld [vmem:[%s382 + $0x6] sm:$0x3]
                  %387 = vst [vmem:[%s383 + $0x2] sm:$0x3] %v386
                  %v388 = vld [vmem:[%s382 + $0xc] sm:$0x3]
                  %389 = vst [vmem:[%s383 + $0x4] sm:$0x3] %v388
                  %v390 = vld [vmem:[%s382 + $0x12] sm:$0x3]
                  %391 = vst [vmem:[%s383 + $0x6] sm:$0x3] %v390
                  %v392 = vld [vmem:[%s382 + $0x18] sm:$0x3]
                  %393 = vst [vmem:[%s383 + $0x8] sm:$0x3] %v392
                  %v394 = vld [vmem:[%s382 + $0x1e] sm:$0x3]
                  %395 = vst [vmem:[%s383 + $0xa] sm:$0x3] %v394
                  %v396 = vld [vmem:[%s382 + $0x24] sm:$0x3]
                  %397 = vst [vmem:[%s383 + $0xc] sm:$0x3] %v396
                  %v398 = vld [vmem:[%s382 + $0x2a] sm:$0x3]
                  %399 = vst [vmem:[%s383 + $0xe] sm:$0x3] %v398
                $region137: #{mha_forward_self.4} parent=124 // loop_footer
                  %s381 = sadd.s32 1, %s377
                $region138: #{mha_forward_self.4} parent=124 // loop_footer_branch
                  %376 = sbr.rel target = $region134
                $region139: #{mha_forward_self.4} parent=124 // loop_exit
                  _
              $region125: #{mha_forward_self.4} parent=109 // pred_fallthru
                _
            $region110: #{mha_forward_self.4} parent=105 // pred_fallthru
              _
            // Predicated region
            $region111: #{mha_forward_self.4} parent=105 // pred_check
              _
            $region112: #{mha_forward_self.4} parent=105 // pred_check_branch
              %339 = sbr.rel (0) target = $region114
            $region113: #{mha_forward_self.4} parent=105 // pred_region
              loop: start=0, step=1, limit=1
              $region115: #{mha_forward_self.4} parent=113 // loop_pre_header
                _
              $region116: #{mha_forward_self.4} parent=113 // loop_header
                %s342 = sphi 0, %s346
                %p343 = scmp.ge.s32.totalorder %s342, 1
                %s347 = sphi %s333, %s333
                %s348 = sphi %s326, %s326
              $region117: #{mha_forward_self.4} parent=113 // loop_header_branch
                %345 = sbr.rel (%p343) target = $region121
              $region118: #{mha_forward_self.4} parent=113 // loop_body
                %v349 = vld [vmem:[%s347] sm:$0x3]
                %350 = vst [vmem:[%s348] sm:$0x3] %v349
                %v351 = vld [vmem:[%s347 + $0x6] sm:$0x3]
                %352 = vst [vmem:[%s348 + $0x2] sm:$0x3] %v351
                %v353 = vld [vmem:[%s347 + $0xc] sm:$0x3]
                %354 = vst [vmem:[%s348 + $0x4] sm:$0x3] %v353
                %v355 = vld [vmem:[%s347 + $0x12] sm:$0x3]
                %356 = vst [vmem:[%s348 + $0x6] sm:$0x3] %v355
                %v357 = vld [vmem:[%s347 + $0x18] sm:$0x3]
                %358 = vst [vmem:[%s348 + $0x8] sm:$0x3] %v357
                %v359 = vld [vmem:[%s347 + $0x1e] sm:$0x3]
                %360 = vst [vmem:[%s348 + $0xa] sm:$0x3] %v359
                %v361 = vld [vmem:[%s347 + $0x24] sm:$0x3]
                %362 = vst [vmem:[%s348 + $0xc] sm:$0x3] %v361
                %v363 = vld [vmem:[%s347 + $0x2a] sm:$0x3]
                %364 = vst [vmem:[%s348 + $0xe] sm:$0x3] %v363
              $region119: #{mha_forward_self.4} parent=113 // loop_footer
                %s346 = sadd.s32 1, %s342
              $region120: #{mha_forward_self.4} parent=113 // loop_footer_branch
                %341 = sbr.rel target = $region116
              $region121: #{mha_forward_self.4} parent=113 // loop_exit
                _
            $region114: #{mha_forward_self.4} parent=105 // pred_fallthru
              _
          $region106: #{mha_forward_self.4} parent=101 // pred_fallthru
            _
          %400 = vnop
        $region102: #{mha_forward_self.4} parent=15 // pred_fallthru
          _
      $region16: #{mha_forward_self.4} parent=5 // pred_fallthru
        _
      %p401 = scmp.le.s32.totalorder 1, %s9
      %p402 = scmp.lt.s32.totalorder %s9, 3
      %p403 = pnand %p401, %p402
      %p404 = pneg %p403
      // Predicated region
      $region140: #{mha_forward_self.4} parent=5 // pred_check
        _
      $region141: #{mha_forward_self.4} parent=5 // pred_check_branch
        %406 = sbr.rel (%p403) target = $region143
      $region142: #{mha_forward_self.4} parent=5 // pred_region
        %s407 = ssub.s32 %s9, 1
        %s408 = sand.u32 %s43, 1
        %s409 = sand.u32 %s43, 1
        %s410 = smul.addr %s409, 16
        %s411 = scalar_lea.vmem [#allocation5], %s410
        // Predicated region
        $region144: #{mha_forward_self.4} parent=142 // pred_check
          %p412 = pneg %p56
        $region145: #{mha_forward_self.4} parent=142 // pred_check_branch
          %414 = sbr.rel (%p412) target = $region147
        $region146: #{mha_forward_self.4} parent=142 // pred_region
          _
        $region147: #{mha_forward_self.4} parent=142 // pred_fallthru
          _
        %s415 = sand.u32 %s71, 1
        %s416 = sand.u32 %s71, 1
        %s417 = smul.addr %s416, 16
        %s418 = scalar_lea.vmem [#allocation6], %s417
        // Predicated region
        $region148: #{mha_forward_self.4} parent=142 // pred_check
          %p419 = pneg %p84
        $region149: #{mha_forward_self.4} parent=142 // pred_check_branch
          %421 = sbr.rel (%p419) target = $region151
        $region150: #{mha_forward_self.4} parent=142 // pred_region
          _
        $region151: #{mha_forward_self.4} parent=142 // pred_fallthru
          _
        %s422 = sand.u32 %s99, 1
        %s423 = sand.u32 %s99, 1
        %s424 = smul.addr %s423, 16
        %s425 = scalar_lea.vmem [#allocation7], %s424
        // Predicated region
        $region152: #{mha_forward_self.4} parent=142 // pred_check
          %p426 = pneg %p112
        $region153: #{mha_forward_self.4} parent=142 // pred_check_branch
          %428 = sbr.rel (%p426) target = $region155
        $region154: #{mha_forward_self.4} parent=142 // pred_region
          _
        $region155: #{mha_forward_self.4} parent=142 // pred_fallthru
          _
        %s429 = sand.u32 %s43, 1
        %s430 = sand.u32 %s43, 1
        %s431 = smul.addr %s430, 16
        %s432 = scalar_lea.vmem [#allocation5], %s431
        %p433 = pneg %p56
        %p434 = pneg %p53
        %s435 = sand.u32 %s71, 1
        %s436 = sand.u32 %s71, 1
        %s437 = smul.addr %s436, 16
        %s438 = scalar_lea.vmem [#allocation6], %s437
        %p439 = pneg %p84
        %p440 = pneg %p81
        %s441 = sand.u32 %s99, 1
        %s442 = sand.u32 %s99, 1
        %s443 = smul.addr %s442, 16
        %s444 = scalar_lea.vmem [#allocation7], %s443
        %p445 = pneg %p112
        %p446 = pneg %p109
        %p447 = pneg %p140
        %p448 = pneg %p137
        %p449 = scmp.lt.s32.totalorder %s19, 1
        %s450 = scalar_select %p449, %s19, 1
        %p451 = scmp.lt.s32.totalorder %s20, 0
        %s452 = scalar_select %p451, %s20, 0
        %s453 = sadd.s32 %s452, %s450
        %s454 = smul.addr %s453, 4
        %s455 = scalar_lea.vmem %s3, %s454
        %s456 = smul.u32 8, %s20
        %s457 = smul.u32 8, %s21
        %s458 = smul.u32 8, %s21
        %p459 = scmp.lt.s32.totalorder %s19, 1
        %s460 = scalar_select %p459, %s19, 1
        %p461 = scmp.lt.s32.totalorder %s20, 0
        %s462 = scalar_select %p461, %s20, 0
        %s463 = sadd.s32 %s462, %s460
        %s464 = smul.addr %s463, 4
        %s465 = scalar_lea.vmem %s3, %s464
        %p467 = scmp.eq.s32.totalorder %s21, 0
        // Predicated region
        $region156: #{mha_forward_self.4} parent=142 // pred_check
          %p468 = pneg %p467
        $region157: #{mha_forward_self.4} parent=142 // pred_check_branch
          %470 = sbr.rel (%p468) target = $region159
        $region158: #{mha_forward_self.4} parent=142 // pred_region
          %vm471 = vcmask 7168
          %472 = vst.msk [vmem:[#allocation2] sm:$0xff] %vm471, -inf
          %473 = vst.msk [vmem:[#allocation2 + $0x8] sm:$0xff] %vm471, -inf
          %474 = vst.msk [vmem:[#allocation2 + $0x10] sm:$0xff] %vm471, -inf
          %475 = vst.msk [vmem:[#allocation2 + $0x18] sm:$0xff] %vm471, -inf
          %476 = vst.msk [vmem:[#allocation3] sm:$0xff] %vm471, 0.0
          %477 = vst.msk [vmem:[#allocation3 + $0x8] sm:$0xff] %vm471, 0.0
          %478 = vst.msk [vmem:[#allocation3 + $0x10] sm:$0xff] %vm471, 0.0
          %479 = vst.msk [vmem:[#allocation3 + $0x18] sm:$0xff] %vm471, 0.0
          %vm480 = vcmask 64512
          %481 = vst.msk [vmem:[#allocation4] sm:$0xff] %vm480, 0.0
          %482 = vst.msk [vmem:[#allocation4 + $0x8] sm:$0xff] %vm480, 0.0
          %483 = vst.msk [vmem:[#allocation4 + $0x10] sm:$0xff] %vm480, 0.0
          %484 = vst.msk [vmem:[#allocation4 + $0x18] sm:$0xff] %vm480, 0.0
        $region159: #{mha_forward_self.4} parent=142 // pred_fallthru
          _
        %v485 = vld [vmem:[%s411] sm:$0x3]
        %v486 = vld [vmem:[%s411 + $0x2] sm:$0x3]
        %v487 = vld [vmem:[%s411 + $0x4] sm:$0x3]
        %v488 = vld [vmem:[%s411 + $0x6] sm:$0x3]
        %v489 = vld [vmem:[%s411 + $0x8] sm:$0x3]
        %v490 = vld [vmem:[%s411 + $0xa] sm:$0x3]
        %v491 = vld [vmem:[%s411 + $0xc] sm:$0x3]
        %v492 = vld [vmem:[%s411 + $0xe] sm:$0x3]
        %v493 = vld [vmem:[%s418] sm:$0x3]
        %v494 = vld [vmem:[%s418 + $0x2] sm:$0x3]
        %v495 = vld [vmem:[%s418 + $0x4] sm:$0x3]
        %v496 = vld [vmem:[%s418 + $0x6] sm:$0x3]
        %v497 = vld [vmem:[%s418 + $0x8] sm:$0x3]
        %v498 = vld [vmem:[%s418 + $0xa] sm:$0x3]
        %v499 = vld [vmem:[%s418 + $0xc] sm:$0x3]
        %v500 = vld [vmem:[%s418 + $0xe] sm:$0x3]
        %v501 = vld [vmem:[%s425] sm:$0x3]
        %v502 = vld [vmem:[%s425 + $0x2] sm:$0x3]
        %v503 = vld [vmem:[%s425 + $0x4] sm:$0x3]
        %v504 = vld [vmem:[%s425 + $0x6] sm:$0x3]
        %v505 = vld [vmem:[%s425 + $0x8] sm:$0x3]
        %v506 = vld [vmem:[%s425 + $0xa] sm:$0x3]
        %v507 = vld [vmem:[%s425 + $0xc] sm:$0x3]
        %v508 = vld [vmem:[%s425 + $0xe] sm:$0x3]
        %v518 = vunpack.c.l.s4 1983009808
        %v519 = vunpack.c.0.s8 %v518
        %v520 = vlaneseq
        %v521 = vshrl.u32 %v520, 7
        %v522 = vsub.s32 %v519, %v521
        %v523 = vrot.slane %v485, %v522
        %v525 = vunpack.c.l.s4 1983009808
        %v526 = vunpack.c.0.s8 %v525
        %v527 = vlaneseq
        %v528 = vshrl.u32 %v527, 7
        %v529 = vsub.s32 %v526, %v528
        %v530 = vrot.slane %v486, %v529
        %v532 = vunpack.c.l.s4 1983009808
        %v533 = vunpack.c.0.s8 %v532
        %v534 = vlaneseq
        %v535 = vshrl.u32 %v534, 7
        %v536 = vsub.s32 %v533, %v535
        %v537 = vrot.slane %v487, %v536
        %v539 = vunpack.c.l.s4 1983009808
        %v540 = vunpack.c.0.s8 %v539
        %v541 = vlaneseq
        %v542 = vshrl.u32 %v541, 7
        %v543 = vsub.s32 %v540, %v542
        %v544 = vrot.slane %v488, %v543
        %v546 = vunpack.c.l.s4 1983009808
        %v547 = vunpack.c.0.s8 %v546
        %v548 = vlaneseq
        %v549 = vshrl.u32 %v548, 7
        %v550 = vsub.s32 %v547, %v549
        %v551 = vrot.slane %v489, %v550
        %v553 = vunpack.c.l.s4 1983009808
        %v554 = vunpack.c.0.s8 %v553
        %v555 = vlaneseq
        %v556 = vshrl.u32 %v555, 7
        %v557 = vsub.s32 %v554, %v556
        %v558 = vrot.slane %v490, %v557
        %v560 = vunpack.c.l.s4 1983009808
        %v561 = vunpack.c.0.s8 %v560
        %v562 = vlaneseq
        %v563 = vshrl.u32 %v562, 7
        %v564 = vsub.s32 %v561, %v563
        %v565 = vrot.slane %v491, %v564
        %v567 = vunpack.c.l.s4 1983009808
        %v568 = vunpack.c.0.s8 %v567
        %v569 = vlaneseq
        %v570 = vshrl.u32 %v569, 7
        %v571 = vsub.s32 %v568, %v570
        %v572 = vrot.slane %v492, %v571
        %v573 = vunpack.c.l.b16 %v523
        %v574 = vunpack.c.l.b16 %v530
        %v575 = vunpack.c.l.b16 %v537
        %v576 = vunpack.c.l.b16 %v544
        %v577 = vunpack.c.l.b16 %v551
        %v578 = vunpack.c.l.b16 %v558
        %v579 = vunpack.c.l.b16 %v565
        %v580 = vunpack.c.l.b16 %v572
        %v581 = vrot.slane %v574, 7
        %vm582 = vcmask 1041409
        %v583 = vsel %vm582, %v581, %v573
        %v584 = vrot.slane %v575, 6
        %vm585 = vcmask 1042434
        %v586 = vsel %vm585, %v584, %v583
        %v587 = vrot.slane %v576, 5
        %vm588 = vcmask 1043459
        %v589 = vsel %vm588, %v587, %v586
        %v590 = vrot.slane %v577, 4
        %vm591 = vcmask 1044484
        %v592 = vsel %vm591, %v590, %v589
        %v593 = vrot.slane %v578, 3
        %vm594 = vcmask 1045509
        %v595 = vsel %vm594, %v593, %v592
        %v596 = vrot.slane %v579, 2
        %vm597 = vcmask 1046534
        %v598 = vsel %vm597, %v596, %v595
        %v599 = vrot.slane %v580, 1
        %vm600 = vcmask 1047559
        %v601 = vsel %vm600, %v599, %v598
        %v602 = vpack.c.b16 %v601, %v601
        %v612 = vunpack.c.l.s4 1983009808
        %v613 = vunpack.c.0.s8 %v612
        %v614 = vlaneseq
        %v615 = vshrl.u32 %v614, 7
        %v616 = vsub.s32 %v613, %v615
        %v617 = vrot.slane %v493, %v616
        %v619 = vunpack.c.l.s4 1983009808
        %v620 = vunpack.c.0.s8 %v619
        %v621 = vlaneseq
        %v622 = vshrl.u32 %v621, 7
        %v623 = vsub.s32 %v620, %v622
        %v624 = vrot.slane %v494, %v623
        %v626 = vunpack.c.l.s4 1983009808
        %v627 = vunpack.c.0.s8 %v626
        %v628 = vlaneseq
        %v629 = vshrl.u32 %v628, 7
        %v630 = vsub.s32 %v627, %v629
        %v631 = vrot.slane %v495, %v630
        %v633 = vunpack.c.l.s4 1983009808
        %v634 = vunpack.c.0.s8 %v633
        %v635 = vlaneseq
        %v636 = vshrl.u32 %v635, 7
        %v637 = vsub.s32 %v634, %v636
        %v638 = vrot.slane %v496, %v637
        %v640 = vunpack.c.l.s4 1983009808
        %v641 = vunpack.c.0.s8 %v640
        %v642 = vlaneseq
        %v643 = vshrl.u32 %v642, 7
        %v644 = vsub.s32 %v641, %v643
        %v645 = vrot.slane %v497, %v644
        %v647 = vunpack.c.l.s4 1983009808
        %v648 = vunpack.c.0.s8 %v647
        %v649 = vlaneseq
        %v650 = vshrl.u32 %v649, 7
        %v651 = vsub.s32 %v648, %v650
        %v652 = vrot.slane %v498, %v651
        %v654 = vunpack.c.l.s4 1983009808
        %v655 = vunpack.c.0.s8 %v654
        %v656 = vlaneseq
        %v657 = vshrl.u32 %v656, 7
        %v658 = vsub.s32 %v655, %v657
        %v659 = vrot.slane %v499, %v658
        %v661 = vunpack.c.l.s4 1983009808
        %v662 = vunpack.c.0.s8 %v661
        %v663 = vlaneseq
        %v664 = vshrl.u32 %v663, 7
        %v665 = vsub.s32 %v662, %v664
        %v666 = vrot.slane %v500, %v665
        %v667 = vunpack.c.l.b16 %v617
        %v668 = vunpack.c.l.b16 %v624
        %v669 = vunpack.c.l.b16 %v631
        %v670 = vunpack.c.l.b16 %v638
        %v671 = vunpack.c.l.b16 %v645
        %v672 = vunpack.c.l.b16 %v652
        %v673 = vunpack.c.l.b16 %v659
        %v674 = vunpack.c.l.b16 %v666
        %v675 = vrot.slane %v668, 7
        %v676 = vsel %vm582, %v675, %v667
        %v677 = vrot.slane %v669, 6
        %v678 = vsel %vm585, %v677, %v676
        %v679 = vrot.slane %v670, 5
        %v680 = vsel %vm588, %v679, %v678
        %v681 = vrot.slane %v671, 4
        %v682 = vsel %vm591, %v681, %v680
        %v683 = vrot.slane %v672, 3
        %v684 = vsel %vm594, %v683, %v682
        %v685 = vrot.slane %v673, 2
        %v686 = vsel %vm597, %v685, %v684
        %v687 = vrot.slane %v674, 1
        %v688 = vsel %vm600, %v687, %v686
        %v689 = vpack.c.b16 %v688, %v688
        %vm690 = vcmask 64512
        %v692 = vsel %vm690, %v602, 0
        %v695 = vsel %vm690, %v689, 0
        %697 = vmatprep.subr.bf16.mxu0 0
        %698 = vmatpush1.bf16.xpose.msra.mxu0 %v695
        %699 = vmatprep.subr.bf16.mxu0 0
        %700 = vmatpush1.bf16.xpose.msra.mxu0 0
        %701 = vmatprep.subr.bf16.mxu0 0
        %702 = vmatpush1.bf16.xpose.msra.mxu0 0
        %703 = vmatprep.subr.bf16.mxu0 0
        %704 = vmatpush1.bf16.xpose.msra.mxu0 0
        %705 = vmatprep.subr.bf16.mxu0 0
        %706 = vmatpush1.bf16.xpose.msra.mxu0 0
        %707 = vmatprep.subr.bf16.mxu0 0
        %708 = vmatpush1.bf16.xpose.msra.mxu0 0
        %709 = vmatprep.subr.bf16.mxu0 0
        %710 = vmatpush1.bf16.xpose.msra.mxu0 0
        %711 = vmatprep.subr.bf16.mxu0 0
        %712 = vmatpush1.bf16.xpose.msra.mxu0 0
        %713 = vmatprep.subr.bf16.mxu0 0
        %714 = vmatpush1.bf16.xpose.msra.mxu0 0
        %715 = vmatprep.subr.bf16.mxu0 0
        %716 = vmatpush1.bf16.xpose.msra.mxu0 0
        %717 = vmatprep.subr.bf16.mxu0 0
        %718 = vmatpush1.bf16.xpose.msra.mxu0 0
        %719 = vmatprep.subr.bf16.mxu0 0
        %720 = vmatpush1.bf16.xpose.msra.mxu0 0
        %721 = vmatprep.subr.bf16.mxu0 0
        %722 = vmatpush1.bf16.xpose.msra.mxu0 0
        %723 = vmatprep.subr.bf16.mxu0 0
        %724 = vmatpush1.bf16.xpose.msra.mxu0 0
        %725 = vmatprep.subr.bf16.mxu0 0
        %726 = vmatpush1.bf16.xpose.msra.mxu0 0
        %727 = vmatprep.subr.bf16.mxu0 0
        %728 = vmatpush1.bf16.xpose.msra.mxu0 0
        %729 = vmatprep.mubr.bf16.mxu0 0
        %730 = vmatmul.mubr.bf16.gmra.mrb[0].mxu0 %v692
        %v731 = vpop.f32.mrb[0].mxu0
        %v732 = vadd.f32 0.0, %v731
        %v733 = vpop.f32.mrb[0].mxu0
        %v734 = vpop.f32.mrb[0].mxu0
        %v735 = vpop.f32.mrb[0].mxu0
        %736 = vdwg.mxu0
        %v737 = vld [vmem:[#allocation2] sm:$0xff]
        %v738 = vsel %vm690, %v732, -inf
        %739 = vmax.xlane.f32.xlu0 %v738
        %v740 = vpop.xlane.xlu0 %739
        %v741 = vmax.f32 %v737, %v740
        %v742 = vsub.f32 %v737, %v741
        %v743 = vmul.f32 %v742, 1.442695
        %v744 = vpow.pop %v743
        %746 = vset.pattern.permute.xlu0 0
        %747 = vperm.xlu0 %746, %v741
        %v748 = vpop.permute.xlu0 %747
        %v750 = vsub.f32 %v732, %v748
        %v751 = vmul.f32 %v750, 1.442695
        %v752 = vpow.pop %v751
        %v753 = vld [vmem:[#allocation3] sm:$0xff]
        %v754 = vmul.f32 %v744, %v753
        %v755 = vsel %vm690, %v752, 0.0
        %756 = vadd.xlane.f32.xlu0 %v755
        %v757 = vpop.xlane.xlu0 %756
        %v758 = vadd.f32 %v754, %v757
        %vm759 = vcmask 7168
        %760 = vst.msk [vmem:[#allocation3] sm:$0xff] %vm759, %v758
        %v761 = vld [vmem:[#allocation4] sm:$0xff]
        %763 = vset.pattern.permute.xlu0 0
        %764 = vperm.xlu0 %763, %v744
        %v765 = vpop.permute.xlu0 %764
        %v767 = vmul.f32 %v765, %v761
        %v768 = vpack.c.bf16 %v752, %v752
        %v778 = vunpack.c.l.s4 1983009808
        %v779 = vunpack.c.0.s8 %v778
        %v780 = vlaneseq
        %v781 = vshrl.u32 %v780, 7
        %v782 = vsub.s32 %v779, %v781
        %v783 = vrot.slane %v501, %v782
        %v785 = vunpack.c.l.s4 1983009808
        %v786 = vunpack.c.0.s8 %v785
        %v787 = vlaneseq
        %v788 = vshrl.u32 %v787, 7
        %v789 = vsub.s32 %v786, %v788
        %v790 = vrot.slane %v502, %v789
        %v792 = vunpack.c.l.s4 1983009808
        %v793 = vunpack.c.0.s8 %v792
        %v794 = vlaneseq
        %v795 = vshrl.u32 %v794, 7
        %v796 = vsub.s32 %v793, %v795
        %v797 = vrot.slane %v503, %v796
        %v799 = vunpack.c.l.s4 1983009808
        %v800 = vunpack.c.0.s8 %v799
        %v801 = vlaneseq
        %v802 = vshrl.u32 %v801, 7
        %v803 = vsub.s32 %v800, %v802
        %v804 = vrot.slane %v504, %v803
        %v806 = vunpack.c.l.s4 1983009808
        %v807 = vunpack.c.0.s8 %v806
        %v808 = vlaneseq
        %v809 = vshrl.u32 %v808, 7
        %v810 = vsub.s32 %v807, %v809
        %v811 = vrot.slane %v505, %v810
        %v813 = vunpack.c.l.s4 1983009808
        %v814 = vunpack.c.0.s8 %v813
        %v815 = vlaneseq
        %v816 = vshrl.u32 %v815, 7
        %v817 = vsub.s32 %v814, %v816
        %v818 = vrot.slane %v506, %v817
        %v820 = vunpack.c.l.s4 1983009808
        %v821 = vunpack.c.0.s8 %v820
        %v822 = vlaneseq
        %v823 = vshrl.u32 %v822, 7
        %v824 = vsub.s32 %v821, %v823
        %v825 = vrot.slane %v507, %v824
        %v827 = vunpack.c.l.s4 1983009808
        %v828 = vunpack.c.0.s8 %v827
        %v829 = vlaneseq
        %v830 = vshrl.u32 %v829, 7
        %v831 = vsub.s32 %v828, %v830
        %v832 = vrot.slane %v508, %v831
        %v833 = vunpack.c.l.b16 %v783
        %v834 = vunpack.c.l.b16 %v790
        %v835 = vunpack.c.l.b16 %v797
        %v836 = vunpack.c.l.b16 %v804
        %v837 = vunpack.c.l.b16 %v811
        %v838 = vunpack.c.l.b16 %v818
        %v839 = vunpack.c.l.b16 %v825
        %v840 = vunpack.c.l.b16 %v832
        %v841 = vrot.slane %v834, 7
        %v842 = vsel %vm582, %v841, %v833
        %v843 = vrot.slane %v835, 6
        %v844 = vsel %vm585, %v843, %v842
        %v845 = vrot.slane %v836, 5
        %v846 = vsel %vm588, %v845, %v844
        %v847 = vrot.slane %v837, 4
        %v848 = vsel %vm591, %v847, %v846
        %v849 = vrot.slane %v838, 3
        %v850 = vsel %vm594, %v849, %v848
        %v851 = vrot.slane %v839, 2
        %v852 = vsel %vm597, %v851, %v850
        %v853 = vrot.slane %v840, 1
        %v854 = vsel %vm600, %v853, %v852
        %v855 = vpack.c.b16 %v854, %v854
        %v857 = vsel %vm690, %v768, 0
        %vm859 = vcmask 1043456
        %v861 = vsel %vm859, %v855, 0
        %863 = vmatprep.subr.bf16.mxu0 0
        %864 = vmatpush1.bf16.msra.mxu0 %v861
        %865 = vmatprep.subr.bf16.mxu0 0
        %866 = vmatpush1.bf16.msra.mxu0 0
        %867 = vmatprep.subr.bf16.mxu0 0
        %868 = vmatpush1.bf16.msra.mxu0 0
        %869 = vmatprep.subr.bf16.mxu0 0
        %870 = vmatpush1.bf16.msra.mxu0 0
        %871 = vmatprep.subr.bf16.mxu0 0
        %872 = vmatpush1.bf16.msra.mxu0 0
        %873 = vmatprep.subr.bf16.mxu0 0
        %874 = vmatpush1.bf16.msra.mxu0 0
        %875 = vmatprep.subr.bf16.mxu0 0
        %876 = vmatpush1.bf16.msra.mxu0 0
        %877 = vmatprep.subr.bf16.mxu0 0
        %878 = vmatpush1.bf16.msra.mxu0 0
        %879 = vmatprep.subr.bf16.mxu0 0
        %880 = vmatpush1.bf16.msra.mxu0 0
        %881 = vmatprep.subr.bf16.mxu0 0
        %882 = vmatpush1.bf16.msra.mxu0 0
        %883 = vmatprep.subr.bf16.mxu0 0
        %884 = vmatpush1.bf16.msra.mxu0 0
        %885 = vmatprep.subr.bf16.mxu0 0
        %886 = vmatpush1.bf16.msra.mxu0 0
        %887 = vmatprep.subr.bf16.mxu0 0
        %888 = vmatpush1.bf16.msra.mxu0 0
        %889 = vmatprep.subr.bf16.mxu0 0
        %890 = vmatpush1.bf16.msra.mxu0 0
        %891 = vmatprep.subr.bf16.mxu0 0
        %892 = vmatpush1.bf16.msra.mxu0 0
        %893 = vmatprep.subr.bf16.mxu0 0
        %894 = vmatpush1.bf16.msra.mxu0 0
        %895 = vmatprep.mubr.bf16.mxu0 0
        %896 = vmatmul.mubr.bf16.gmra.mrb[0].mxu0 %v857
        %v897 = vpop.f32.mrb[0].mxu0
        %v898 = vadd.f32 0.0, %v897
        %v899 = vpop.f32.mrb[0].mxu0
        %v900 = vpop.f32.mrb[0].mxu0
        %v901 = vpop.f32.mrb[0].mxu0
        %902 = vdwg.mxu0
        %v903 = vadd.f32 %v767, %v898
        %904 = vst.msk [vmem:[#allocation4] sm:$0xff] %vm690, %v903
        %905 = vst.msk [vmem:[#allocation2] sm:$0xff] %vm759, %v741
        %v906 = vrot.slane %v573, 1
        %v907 = vsel %vm582, %v574, %v906
        %v908 = vrot.slane %v575, 7
        %v909 = vsel %vm585, %v908, %v907
        %v910 = vrot.slane %v576, 6
        %v911 = vsel %vm588, %v910, %v909
        %v912 = vrot.slane %v577, 5
        %v913 = vsel %vm591, %v912, %v911
        %v914 = vrot.slane %v578, 4
        %v915 = vsel %vm594, %v914, %v913
        %v916 = vrot.slane %v579, 3
        %v917 = vsel %vm597, %v916, %v915
        %v918 = vrot.slane %v580, 2
        %v919 = vsel %vm600, %v918, %v917
        %v920 = vpack.c.b16 %v919, %v919
        %v921 = vrot.slane %v667, 1
        %v922 = vsel %vm582, %v668, %v921
        %v923 = vrot.slane %v669, 7
        %v924 = vsel %vm585, %v923, %v922
        %v925 = vrot.slane %v670, 6
        %v926 = vsel %vm588, %v925, %v924
        %v927 = vrot.slane %v671, 5
        %v928 = vsel %vm591, %v927, %v926
        %v929 = vrot.slane %v672, 4
        %v930 = vsel %vm594, %v929, %v928
        %v931 = vrot.slane %v673, 3
        %v932 = vsel %vm597, %v931, %v930
        %v933 = vrot.slane %v674, 2
        %v934 = vsel %vm600, %v933, %v932
        %v935 = vpack.c.b16 %v934, %v934
        %v937 = vsel %vm690, %v920, 0
        %v940 = vsel %vm690, %v935, 0
        %942 = vmatprep.subr.bf16.mxu0 0
        %943 = vmatpush1.bf16.xpose.msra.mxu0 %v940
        %944 = vmatprep.subr.bf16.mxu0 0
        %945 = vmatpush1.bf16.xpose.msra.mxu0 0
        %946 = vmatprep.subr.bf16.mxu0 0
        %947 = vmatpush1.bf16.xpose.msra.mxu0 0
        %948 = vmatprep.subr.bf16.mxu0 0
        %949 = vmatpush1.bf16.xpose.msra.mxu0 0
        %950 = vmatprep.subr.bf16.mxu0 0
        %951 = vmatpush1.bf16.xpose.msra.mxu0 0
        %952 = vmatprep.subr.bf16.mxu0 0
        %953 = vmatpush1.bf16.xpose.msra.mxu0 0
        %954 = vmatprep.subr.bf16.mxu0 0
        %955 = vmatpush1.bf16.xpose.msra.mxu0 0
        %956 = vmatprep.subr.bf16.mxu0 0
        %957 = vmatpush1.bf16.xpose.msra.mxu0 0
        %958 = vmatprep.subr.bf16.mxu0 0
        %959 = vmatpush1.bf16.xpose.msra.mxu0 0
        %960 = vmatprep.subr.bf16.mxu0 0
        %961 = vmatpush1.bf16.xpose.msra.mxu0 0
        %962 = vmatprep.subr.bf16.mxu0 0
        %963 = vmatpush1.bf16.xpose.msra.mxu0 0
        %964 = vmatprep.subr.bf16.mxu0 0
        %965 = vmatpush1.bf16.xpose.msra.mxu0 0
        %966 = vmatprep.subr.bf16.mxu0 0
        %967 = vmatpush1.bf16.xpose.msra.mxu0 0
        %968 = vmatprep.subr.bf16.mxu0 0
        %969 = vmatpush1.bf16.xpose.msra.mxu0 0
        %970 = vmatprep.subr.bf16.mxu0 0
        %971 = vmatpush1.bf16.xpose.msra.mxu0 0
        %972 = vmatprep.subr.bf16.mxu0 0
        %973 = vmatpush1.bf16.xpose.msra.mxu0 0
        %974 = vmatprep.mubr.bf16.mxu0 0
        %975 = vmatmul.mubr.bf16.gmra.mrb[0].mxu0 %v937
        %v976 = vpop.f32.mrb[0].mxu0
        %v977 = vadd.f32 0.0, %v976
        %v978 = vpop.f32.mrb[0].mxu0
        %v979 = vpop.f32.mrb[0].mxu0
        %v980 = vpop.f32.mrb[0].mxu0
        %981 = vdwg.mxu0
        %s982 = scalar_lea.vmem [#allocation2], 8
        %v983 = vld [vmem:[%s982] sm:$0xff]
        %v984 = vsel %vm690, %v977, -inf
        %985 = vmax.xlane.f32.xlu0 %v984
        %v986 = vpop.xlane.xlu0 %985
        %v987 = vmax.f32 %v983, %v986
        %v988 = vsub.f32 %v983, %v987
        %v989 = vmul.f32 %v988, 1.442695
        %v990 = vpow.pop %v989
        %992 = vset.pattern.permute.xlu0 0
        %993 = vperm.xlu0 %992, %v987
        %v994 = vpop.permute.xlu0 %993
        %v996 = vsub.f32 %v977, %v994
        %v997 = vmul.f32 %v996, 1.442695
        %v998 = vpow.pop %v997
        %s999 = scalar_lea.vmem [#allocation3], 8
        %v1000 = vld [vmem:[%s999] sm:$0xff]
        %v1001 = vmul.f32 %v990, %v1000
        %v1002 = vsel %vm690, %v998, 0.0
        %1003 = vadd.xlane.f32.xlu0 %v1002
        %v1004 = vpop.xlane.xlu0 %1003
        %v1005 = vadd.f32 %v1001, %v1004
        %1006 = vst.msk [vmem:[%s999] sm:$0xff] %vm759, %v1005
        %s1007 = scalar_lea.vmem [#allocation4], 8
        %v1008 = vld [vmem:[%s1007] sm:$0xff]
        %1010 = vset.pattern.permute.xlu0 0
        %1011 = vperm.xlu0 %1010, %v990
        %v1012 = vpop.permute.xlu0 %1011
        %v1014 = vmul.f32 %v1012, %v1008
        %v1015 = vpack.c.bf16 %v998, %v998
        %v1016 = vrot.slane %v833, 1
        %v1017 = vsel %vm582, %v834, %v1016
        %v1018 = vrot.slane %v835, 7
        %v1019 = vsel %vm585, %v1018, %v1017
        %v1020 = vrot.slane %v836, 6
        %v1021 = vsel %vm588, %v1020, %v1019
        %v1022 = vrot.slane %v837, 5
        %v1023 = vsel %vm591, %v1022, %v1021
        %v1024 = vrot.slane %v838, 4
        %v1025 = vsel %vm594, %v1024, %v1023
        %v1026 = vrot.slane %v839, 3
        %v1027 = vsel %vm597, %v1026, %v1025
        %v1028 = vrot.slane %v840, 2
        %v1029 = vsel %vm600, %v1028, %v1027
        %v1030 = vpack.c.b16 %v1029, %v1029
        %v1032 = vsel %vm690, %v1015, 0
        %v1035 = vsel %vm859, %v1030, 0
        %1037 = vmatprep.subr.bf16.mxu0 0
        %1038 = vmatpush1.bf16.msra.mxu0 %v1035
        %1039 = vmatprep.subr.bf16.mxu0 0
        %1040 = vmatpush1.bf16.msra.mxu0 0
        %1041 = vmatprep.subr.bf16.mxu0 0
        %1042 = vmatpush1.bf16.msra.mxu0 0
        %1043 = vmatprep.subr.bf16.mxu0 0
        %1044 = vmatpush1.bf16.msra.mxu0 0
        %1045 = vmatprep.subr.bf16.mxu0 0
        %1046 = vmatpush1.bf16.msra.mxu0 0
        %1047 = vmatprep.subr.bf16.mxu0 0
        %1048 = vmatpush1.bf16.msra.mxu0 0
        %1049 = vmatprep.subr.bf16.mxu0 0
        %1050 = vmatpush1.bf16.msra.mxu0 0
        %1051 = vmatprep.subr.bf16.mxu0 0
        %1052 = vmatpush1.bf16.msra.mxu0 0
        %1053 = vmatprep.subr.bf16.mxu0 0
        %1054 = vmatpush1.bf16.msra.mxu0 0
        %1055 = vmatprep.subr.bf16.mxu0 0
        %1056 = vmatpush1.bf16.msra.mxu0 0
        %1057 = vmatprep.subr.bf16.mxu0 0
        %1058 = vmatpush1.bf16.msra.mxu0 0
        %1059 = vmatprep.subr.bf16.mxu0 0
        %1060 = vmatpush1.bf16.msra.mxu0 0
        %1061 = vmatprep.subr.bf16.mxu0 0
        %1062 = vmatpush1.bf16.msra.mxu0 0
        %1063 = vmatprep.subr.bf16.mxu0 0
        %1064 = vmatpush1.bf16.msra.mxu0 0
        %1065 = vmatprep.subr.bf16.mxu0 0
        %1066 = vmatpush1.bf16.msra.mxu0 0
        %1067 = vmatprep.subr.bf16.mxu0 0
        %1068 = vmatpush1.bf16.msra.mxu0 0
        %1069 = vmatprep.mubr.bf16.mxu0 0
        %1070 = vmatmul.mubr.bf16.gmra.mrb[0].mxu0 %v1032
        %v1071 = vpop.f32.mrb[0].mxu0
        %v1072 = vadd.f32 0.0, %v1071
        %v1073 = vpop.f32.mrb[0].mxu0
        %v1074 = vpop.f32.mrb[0].mxu0
        %v1075 = vpop.f32.mrb[0].mxu0
        %1076 = vdwg.mxu0
        %v1077 = vadd.f32 %v1014, %v1072
        %1078 = vst.msk [vmem:[%s1007] sm:$0xff] %vm690, %v1077
        %1079 = vst.msk [vmem:[%s982] sm:$0xff] %vm759, %v987
        %v1080 = vrot.slane %v573, 2
        %v1081 = vrot.slane %v574, 1
        %v1082 = vsel %vm582, %v1081, %v1080
        %v1083 = vsel %vm585, %v575, %v1082
        %v1084 = vrot.slane %v576, 7
        %v1085 = vsel %vm588, %v1084, %v1083
        %v1086 = vrot.slane %v577, 6
        %v1087 = vsel %vm591, %v1086, %v1085
        %v1088 = vrot.slane %v578, 5
        %v1089 = vsel %vm594, %v1088, %v1087
        %v1090 = vrot.slane %v579, 4
        %v1091 = vsel %vm597, %v1090, %v1089
        %v1092 = vrot.slane %v580, 3
        %v1093 = vsel %vm600, %v1092, %v1091
        %v1094 = vpack.c.b16 %v1093, %v1093
        %v1095 = vrot.slane %v667, 2
        %v1096 = vrot.slane %v668, 1
        %v1097 = vsel %vm582, %v1096, %v1095
        %v1098 = vsel %vm585, %v669, %v1097
        %v1099 = vrot.slane %v670, 7
        %v1100 = vsel %vm588, %v1099, %v1098
        %v1101 = vrot.slane %v671, 6
        %v1102 = vsel %vm591, %v1101, %v1100
        %v1103 = vrot.slane %v672, 5
        %v1104 = vsel %vm594, %v1103, %v1102
        %v1105 = vrot.slane %v673, 4
        %v1106 = vsel %vm597, %v1105, %v1104
        %v1107 = vrot.slane %v674, 3
        %v1108 = vsel %vm600, %v1107, %v1106
        %v1109 = vpack.c.b16 %v1108, %v1108
        %v1111 = vsel %vm690, %v1094, 0
        %v1114 = vsel %vm690, %v1109, 0
        %1116 = vmatprep.subr.bf16.mxu0 0
        %1117 = vmatpush1.bf16.xpose.msra.mxu0 %v1114
        %1118 = vmatprep.subr.bf16.mxu0 0
        %1119 = vmatpush1.bf16.xpose.msra.mxu0 0
        %1120 = vmatprep.subr.bf16.mxu0 0
        %1121 = vmatpush1.bf16.xpose.msra.mxu0 0
        %1122 = vmatprep.subr.bf16.mxu0 0
        %1123 = vmatpush1.bf16.xpose.msra.mxu0 0
        %1124 = vmatprep.subr.bf16.mxu0 0
        %1125 = vmatpush1.bf16.xpose.msra.mxu0 0
        %1126 = vmatprep.subr.bf16.mxu0 0
        %1127 = vmatpush1.bf16.xpose.msra.mxu0 0
        %1128 = vmatprep.subr.bf16.mxu0 0
        %1129 = vmatpush1.bf16.xpose.msra.mxu0 0
        %1130 = vmatprep.subr.bf16.mxu0 0
        %1131 = vmatpush1.bf16.xpose.msra.mxu0 0
        %1132 = vmatprep.subr.bf16.mxu0 0
        %1133 = vmatpush1.bf16.xpose.msra.mxu0 0
        %1134 = vmatprep.subr.bf16.mxu0 0
        %1135 = vmatpush1.bf16.xpose.msra.mxu0 0
        %1136 = vmatprep.subr.bf16.mxu0 0
        %1137 = vmatpush1.bf16.xpose.msra.mxu0 0
        %1138 = vmatprep.subr.bf16.mxu0 0
        %1139 = vmatpush1.bf16.xpose.msra.mxu0 0
        %1140 = vmatprep.subr.bf16.mxu0 0
        %1141 = vmatpush1.bf16.xpose.msra.mxu0 0
        %1142 = vmatprep.subr.bf16.mxu0 0
        %1143 = vmatpush1.bf16.xpose.msra.mxu0 0
        %1144 = vmatprep.subr.bf16.mxu0 0
        %1145 = vmatpush1.bf16.xpose.msra.mxu0 0
        %1146 = vmatprep.subr.bf16.mxu0 0
        %1147 = vmatpush1.bf16.xpose.msra.mxu0 0
        %1148 = vmatprep.mubr.bf16.mxu0 0
        %1149 = vmatmul.mubr.bf16.gmra.mrb[0].mxu0 %v1111
        %v1150 = vpop.f32.mrb[0].mxu0
        %v1151 = vadd.f32 0.0, %v1150
        %v1152 = vpop.f32.mrb[0].mxu0
        %v1153 = vpop.f32.mrb[0].mxu0
        %v1154 = vpop.f32.mrb[0].mxu0
        %1155 = vdwg.mxu0
        %s1156 = scalar_lea.vmem [#allocation2], 16
        %v1157 = vld [vmem:[%s1156] sm:$0xff]
        %v1158 = vsel %vm690, %v1151, -inf
        %1159 = vmax.xlane.f32.xlu0 %v1158
        %v1160 = vpop.xlane.xlu0 %1159
        %v1161 = vmax.f32 %v1157, %v1160
        %v1162 = vsub.f32 %v1157, %v1161
        %v1163 = vmul.f32 %v1162, 1.442695
        %v1164 = vpow.pop %v1163
        %1166 = vset.pattern.permute.xlu0 0
        %1167 = vperm.xlu0 %1166, %v1161
        %v1168 = vpop.permute.xlu0 %1167
        %v1170 = vsub.f32 %v1151, %v1168
        %v1171 = vmul.f32 %v1170, 1.442695
        %v1172 = vpow.pop %v1171
        %s1173 = scalar_lea.vmem [#allocation3], 16
        %v1174 = vld [vmem:[%s1173] sm:$0xff]
        %v1175 = vmul.f32 %v1164, %v1174
        %v1176 = vsel %vm690, %v1172, 0.0
        %1177 = vadd.xlane.f32.xlu0 %v1176
        %v1178 = vpop.xlane.xlu0 %1177
        %v1179 = vadd.f32 %v1175, %v1178
        %1180 = vst.msk [vmem:[%s1173] sm:$0xff] %vm759, %v1179
        %s1181 = scalar_lea.vmem [#allocation4], 16
        %v1182 = vld [vmem:[%s1181] sm:$0xff]
        %1184 = vset.pattern.permute.xlu0 0
        %1185 = vperm.xlu0 %1184, %v1164
        %v1186 = vpop.permute.xlu0 %1185
        %v1188 = vmul.f32 %v1186, %v1182
        %v1189 = vpack.c.bf16 %v1172, %v1172
        %v1190 = vrot.slane %v833, 2
        %v1191 = vrot.slane %v834, 1
        %v1192 = vsel %vm582, %v1191, %v1190
        %v1193 = vsel %vm585, %v835, %v1192
        %v1194 = vrot.slane %v836, 7
        %v1195 = vsel %vm588, %v1194, %v1193
        %v1196 = vrot.slane %v837, 6
        %v1197 = vsel %vm591, %v1196, %v1195
        %v1198 = vrot.slane %v838, 5
        %v1199 = vsel %vm594, %v1198, %v1197
        %v1200 = vrot.slane %v839, 4
        %v1201 = vsel %vm597, %v1200, %v1199
        %v1202 = vrot.slane %v840, 3
        %v1203 = vsel %vm600, %v1202, %v1201
        %v1204 = vpack.c.b16 %v1203, %v1203
        %v1206 = vsel %vm690, %v1189, 0
        %v1209 = vsel %vm859, %v1204, 0
        %1211 = vmatprep.subr.bf16.mxu0 0
        %1212 = vmatpush1.bf16.msra.mxu0 %v1209
        %1213 = vmatprep.subr.bf16.mxu0 0
        %1214 = vmatpush1.bf16.msra.mxu0 0
        %1215 = vmatprep.subr.bf16.mxu0 0
        %1216 = vmatpush1.bf16.msra.mxu0 0
        %1217 = vmatprep.subr.bf16.mxu0 0
        %1218 = vmatpush1.bf16.msra.mxu0 0
        %1219 = vmatprep.subr.bf16.mxu0 0
        %1220 = vmatpush1.bf16.msra.mxu0 0
        %1221 = vmatprep.subr.bf16.mxu0 0
        %1222 = vmatpush1.bf16.msra.mxu0 0
        %1223 = vmatprep.subr.bf16.mxu0 0
        %1224 = vmatpush1.bf16.msra.mxu0 0
        %1225 = vmatprep.subr.bf16.mxu0 0
        %1226 = vmatpush1.bf16.msra.mxu0 0
        %1227 = vmatprep.subr.bf16.mxu0 0
        %1228 = vmatpush1.bf16.msra.mxu0 0
        %1229 = vmatprep.subr.bf16.mxu0 0
        %1230 = vmatpush1.bf16.msra.mxu0 0
        %1231 = vmatprep.subr.bf16.mxu0 0
        %1232 = vmatpush1.bf16.msra.mxu0 0
        %1233 = vmatprep.subr.bf16.mxu0 0
        %1234 = vmatpush1.bf16.msra.mxu0 0
        %1235 = vmatprep.subr.bf16.mxu0 0
        %1236 = vmatpush1.bf16.msra.mxu0 0
        %1237 = vmatprep.subr.bf16.mxu0 0
        %1238 = vmatpush1.bf16.msra.mxu0 0
        %1239 = vmatprep.subr.bf16.mxu0 0
        %1240 = vmatpush1.bf16.msra.mxu0 0
        %1241 = vmatprep.subr.bf16.mxu0 0
        %1242 = vmatpush1.bf16.msra.mxu0 0
        %1243 = vmatprep.mubr.bf16.mxu0 0
        %1244 = vmatmul.mubr.bf16.gmra.mrb[0].mxu0 %v1206
        %v1245 = vpop.f32.mrb[0].mxu0
        %v1246 = vadd.f32 0.0, %v1245
        %v1247 = vpop.f32.mrb[0].mxu0
        %v1248 = vpop.f32.mrb[0].mxu0
        %v1249 = vpop.f32.mrb[0].mxu0
        %1250 = vdwg.mxu0
        %v1251 = vadd.f32 %v1188, %v1246
        %1252 = vst.msk [vmem:[%s1181] sm:$0xff] %vm690, %v1251
        %1253 = vst.msk [vmem:[%s1156] sm:$0xff] %vm759, %v1161
        %v1254 = vrot.slane %v573, 3
        %v1255 = vrot.slane %v574, 2
        %v1256 = vsel %vm582, %v1255, %v1254
        %v1257 = vrot.slane %v575, 1
        %v1258 = vsel %vm585, %v1257, %v1256
        %v1259 = vsel %vm588, %v576, %v1258
        %v1260 = vrot.slane %v577, 7
        %v1261 = vsel %vm591, %v1260, %v1259
        %v1262 = vrot.slane %v578, 6
        %v1263 = vsel %vm594, %v1262, %v1261
        %v1264 = vrot.slane %v579, 5
        %v1265 = vsel %vm597, %v1264, %v1263
        %v1266 = vrot.slane %v580, 4
        %v1267 = vsel %vm600, %v1266, %v1265
        %v1268 = vpack.c.b16 %v1267, %v1267
        %v1269 = vrot.slane %v667, 3
        %v1270 = vrot.slane %v668, 2
        %v1271 = vsel %vm582, %v1270, %v1269
        %v1272 = vrot.slane %v669, 1
        %v1273 = vsel %vm585, %v1272, %v1271
        %v1274 = vsel %vm588, %v670, %v1273
        %v1275 = vrot.slane %v671, 7
        %v1276 = vsel %vm591, %v1275, %v1274
        %v1277 = vrot.slane %v672, 6
        %v1278 = vsel %vm594, %v1277, %v1276
        %v1279 = vrot.slane %v673, 5
        %v1280 = vsel %vm597, %v1279, %v1278
        %v1281 = vrot.slane %v674, 4
        %v1282 = vsel %vm600, %v1281, %v1280
        %v1283 = vpack.c.b16 %v1282, %v1282
        %v1285 = vsel %vm690, %v1268, 0
        %v1288 = vsel %vm690, %v1283, 0
        %1290 = vmatprep.subr.bf16.mxu0 0
        %1291 = vmatpush1.bf16.xpose.msra.mxu0 %v1288
        %1292 = vmatprep.subr.bf16.mxu0 0
        %1293 = vmatpush1.bf16.xpose.msra.mxu0 0
        %1294 = vmatprep.subr.bf16.mxu0 0
        %1295 = vmatpush1.bf16.xpose.msra.mxu0 0
        %1296 = vmatprep.subr.bf16.mxu0 0
        %1297 = vmatpush1.bf16.xpose.msra.mxu0 0
        %1298 = vmatprep.subr.bf16.mxu0 0
        %1299 = vmatpush1.bf16.xpose.msra.mxu0 0
        %1300 = vmatprep.subr.bf16.mxu0 0
        %1301 = vmatpush1.bf16.xpose.msra.mxu0 0
        %1302 = vmatprep.subr.bf16.mxu0 0
        %1303 = vmatpush1.bf16.xpose.msra.mxu0 0
        %1304 = vmatprep.subr.bf16.mxu0 0
        %1305 = vmatpush1.bf16.xpose.msra.mxu0 0
        %1306 = vmatprep.subr.bf16.mxu0 0
        %1307 = vmatpush1.bf16.xpose.msra.mxu0 0
        %1308 = vmatprep.subr.bf16.mxu0 0
        %1309 = vmatpush1.bf16.xpose.msra.mxu0 0
        %1310 = vmatprep.subr.bf16.mxu0 0
        %1311 = vmatpush1.bf16.xpose.msra.mxu0 0
        %1312 = vmatprep.subr.bf16.mxu0 0
        %1313 = vmatpush1.bf16.xpose.msra.mxu0 0
        %1314 = vmatprep.subr.bf16.mxu0 0
        %1315 = vmatpush1.bf16.xpose.msra.mxu0 0
        %1316 = vmatprep.subr.bf16.mxu0 0
        %1317 = vmatpush1.bf16.xpose.msra.mxu0 0
        %1318 = vmatprep.subr.bf16.mxu0 0
        %1319 = vmatpush1.bf16.xpose.msra.mxu0 0
        %1320 = vmatprep.subr.bf16.mxu0 0
        %1321 = vmatpush1.bf16.xpose.msra.mxu0 0
        %1322 = vmatprep.mubr.bf16.mxu0 0
        %1323 = vmatmul.mubr.bf16.gmra.mrb[0].mxu0 %v1285
        %v1324 = vpop.f32.mrb[0].mxu0
        %v1325 = vadd.f32 0.0, %v1324
        %v1326 = vpop.f32.mrb[0].mxu0
        %v1327 = vpop.f32.mrb[0].mxu0
        %v1328 = vpop.f32.mrb[0].mxu0
        %1329 = vdwg.mxu0
        %s1330 = scalar_lea.vmem [#allocation2], 24
        %v1331 = vld [vmem:[%s1330] sm:$0xff]
        %v1332 = vsel %vm690, %v1325, -inf
        %1333 = vmax.xlane.f32.xlu0 %v1332
        %v1334 = vpop.xlane.xlu0 %1333
        %v1335 = vmax.f32 %v1331, %v1334
        %v1336 = vsub.f32 %v1331, %v1335
        %v1337 = vmul.f32 %v1336, 1.442695
        %v1338 = vpow.pop %v1337
        %1340 = vset.pattern.permute.xlu0 0
        %1341 = vperm.xlu0 %1340, %v1335
        %v1342 = vpop.permute.xlu0 %1341
        %v1344 = vsub.f32 %v1325, %v1342
        %v1345 = vmul.f32 %v1344, 1.442695
        %v1346 = vpow.pop %v1345
        %s1347 = scalar_lea.vmem [#allocation3], 24
        %v1348 = vld [vmem:[%s1347] sm:$0xff]
        %v1349 = vmul.f32 %v1338, %v1348
        %v1350 = vsel %vm690, %v1346, 0.0
        %1351 = vadd.xlane.f32.xlu0 %v1350
        %v1352 = vpop.xlane.xlu0 %1351
        %v1353 = vadd.f32 %v1349, %v1352
        %1354 = vst.msk [vmem:[%s1347] sm:$0xff] %vm759, %v1353
        %s1355 = scalar_lea.vmem [#allocation4], 24
        %v1356 = vld [vmem:[%s1355] sm:$0xff]
        %1358 = vset.pattern.permute.xlu0 0
        %1359 = vperm.xlu0 %1358, %v1338
        %v1360 = vpop.permute.xlu0 %1359
        %v1362 = vmul.f32 %v1360, %v1356
        %v1363 = vpack.c.bf16 %v1346, %v1346
        %v1364 = vrot.slane %v833, 3
        %v1365 = vrot.slane %v834, 2
        %v1366 = vsel %vm582, %v1365, %v1364
        %v1367 = vrot.slane %v835, 1
        %v1368 = vsel %vm585, %v1367, %v1366
        %v1369 = vsel %vm588, %v836, %v1368
        %v1370 = vrot.slane %v837, 7
        %v1371 = vsel %vm591, %v1370, %v1369
        %v1372 = vrot.slane %v838, 6
        %v1373 = vsel %vm594, %v1372, %v1371
        %v1374 = vrot.slane %v839, 5
        %v1375 = vsel %vm597, %v1374, %v1373
        %v1376 = vrot.slane %v840, 4
        %v1377 = vsel %vm600, %v1376, %v1375
        %v1378 = vpack.c.b16 %v1377, %v1377
        %v1380 = vsel %vm690, %v1363, 0
        %v1383 = vsel %vm859, %v1378, 0
        %1385 = vmatprep.subr.bf16.mxu0 0
        %1386 = vmatpush1.bf16.msra.mxu0 %v1383
        %1387 = vmatprep.subr.bf16.mxu0 0
        %1388 = vmatpush1.bf16.msra.mxu0 0
        %1389 = vmatprep.subr.bf16.mxu0 0
        %1390 = vmatpush1.bf16.msra.mxu0 0
        %1391 = vmatprep.subr.bf16.mxu0 0
        %1392 = vmatpush1.bf16.msra.mxu0 0
        %1393 = vmatprep.subr.bf16.mxu0 0
        %1394 = vmatpush1.bf16.msra.mxu0 0
        %1395 = vmatprep.subr.bf16.mxu0 0
        %1396 = vmatpush1.bf16.msra.mxu0 0
        %1397 = vmatprep.subr.bf16.mxu0 0
        %1398 = vmatpush1.bf16.msra.mxu0 0
        %1399 = vmatprep.subr.bf16.mxu0 0
        %1400 = vmatpush1.bf16.msra.mxu0 0
        %1401 = vmatprep.subr.bf16.mxu0 0
        %1402 = vmatpush1.bf16.msra.mxu0 0
        %1403 = vmatprep.subr.bf16.mxu0 0
        %1404 = vmatpush1.bf16.msra.mxu0 0
        %1405 = vmatprep.subr.bf16.mxu0 0
        %1406 = vmatpush1.bf16.msra.mxu0 0
        %1407 = vmatprep.subr.bf16.mxu0 0
        %1408 = vmatpush1.bf16.msra.mxu0 0
        %1409 = vmatprep.subr.bf16.mxu0 0
        %1410 = vmatpush1.bf16.msra.mxu0 0
        %1411 = vmatprep.subr.bf16.mxu0 0
        %1412 = vmatpush1.bf16.msra.mxu0 0
        %1413 = vmatprep.subr.bf16.mxu0 0
        %1414 = vmatpush1.bf16.msra.mxu0 0
        %1415 = vmatprep.subr.bf16.mxu0 0
        %1416 = vmatpush1.bf16.msra.mxu0 0
        %1417 = vmatprep.mubr.bf16.mxu0 0
        %1418 = vmatmul.mubr.bf16.gmra.mrb[0].mxu0 %v1380
        %v1419 = vpop.f32.mrb[0].mxu0
        %v1420 = vadd.f32 0.0, %v1419
        %v1421 = vpop.f32.mrb[0].mxu0
        %v1422 = vpop.f32.mrb[0].mxu0
        %v1423 = vpop.f32.mrb[0].mxu0
        %1424 = vdwg.mxu0
        %v1425 = vadd.f32 %v1362, %v1420
        %1426 = vst.msk [vmem:[%s1355] sm:$0xff] %vm690, %v1425
        %1427 = vst.msk [vmem:[%s1330] sm:$0xff] %vm759, %v1335
        // Predicated region
        $region160: #{mha_forward_self.4} parent=142 // pred_check
          %p1428 = pneg %p467
        $region161: #{mha_forward_self.4} parent=142 // pred_check_branch
          %1430 = sbr.rel (%p1428) target = $region163
        $region162: #{mha_forward_self.4} parent=142 // pred_region
          %v1431 = vld [vmem:[#allocation4] sm:$0xff]
          %v1432 = vld [vmem:[#allocation3] sm:$0xff]
          %1434 = vset.pattern.permute.xlu0 0
          %1435 = vperm.xlu0 %1434, %v1432
          %v1436 = vpop.permute.xlu0 %1435
          %v1438 = vrcp.pop %v1436
          %v1439 = vmul.f32 %v1431, %v1438
          %v1440 = vpack.c.bf16 %v1439, %v1439
          %v1441 = vld [vmem:[%s1007] sm:$0xff]
          %v1442 = vld [vmem:[%s999] sm:$0xff]
          %1444 = vset.pattern.permute.xlu0 0
          %1445 = vperm.xlu0 %1444, %v1442
          %v1446 = vpop.permute.xlu0 %1445
          %v1448 = vrcp.pop %v1446
          %v1449 = vmul.f32 %v1441, %v1448
          %v1450 = vpack.c.bf16 %v1449, %v1449
          %v1451 = vld [vmem:[%s1181] sm:$0xff]
          %v1452 = vld [vmem:[%s1173] sm:$0xff]
          %1454 = vset.pattern.permute.xlu0 0
          %1455 = vperm.xlu0 %1454, %v1452
          %v1456 = vpop.permute.xlu0 %1455
          %v1458 = vrcp.pop %v1456
          %v1459 = vmul.f32 %v1451, %v1458
          %v1460 = vpack.c.bf16 %v1459, %v1459
          %v1461 = vld [vmem:[%s1355] sm:$0xff]
          %v1462 = vld [vmem:[%s1347] sm:$0xff]
          %1464 = vset.pattern.permute.xlu0 0
          %1465 = vperm.xlu0 %1464, %v1462
          %v1466 = vpop.permute.xlu0 %1465
          %v1468 = vrcp.pop %v1466
          %v1469 = vmul.f32 %v1461, %v1468
          %v1470 = vpack.c.bf16 %v1469, %v1469
          %1472 = vrot.lane.b32.xlu0 %v1450, 8
          %v1473 = vpop.permute.xlu0 %1472
          %1475 = vrot.lane.b32.xlu0 %v1460, 16
          %v1476 = vpop.permute.xlu0 %1475
          %1478 = vrot.lane.b32.xlu0 %v1470, 24
          %v1479 = vpop.permute.xlu0 %1478
          %v1482 = vsel %vm690, %v1440, %v1473
          %vm1483 = vcmask 130048
          %v1485 = vsel %vm1483, %v1482, %v1476
          %vm1486 = vcmask 195584
          %v1488 = vsel %vm1486, %v1485, %v1479
          %vm1490 = vcmask 257024
          %1491 = vst.msk [vmem:[%s465] sm:$0xf] %vm1490, %v1488
        $region163: #{mha_forward_self.4} parent=142 // pred_fallthru
          _
        %p1492 = scmp.lt.s32.totalorder %s19, 1
        %s1493 = scalar_select %p1492, %s19, 1
        %p1494 = scmp.lt.s32.totalorder %s20, 0
        %s1495 = scalar_select %p1494, %s20, 0
        %s1496 = sadd.s32 %s1495, %s1493
        %s1497 = smul.addr %s1496, 4
        %s1498 = scalar_lea.vmem %s3, %s1497
        // Predicated region
        $region164: #{mha_forward_self.4} parent=142 // pred_check
          %p1499 = pneg %p137
        $region165: #{mha_forward_self.4} parent=142 // pred_check_branch
          %1501 = sbr.rel (%p1499) target = $region167
        $region166: #{mha_forward_self.4} parent=142 // pred_region
          _
        $region167: #{mha_forward_self.4} parent=142 // pred_fallthru
          _
      $region143: #{mha_forward_self.4} parent=5 // pred_fallthru
        _
      %p1502 = scmp.le.s32.totalorder 2, %s9
      // Predicated region
      $region168: #{mha_forward_self.4} parent=5 // pred_check
        %p1503 = pneg %p1502
      $region169: #{mha_forward_self.4} parent=5 // pred_check_branch
        %1505 = sbr.rel (%p1503) target = $region171
      $region170: #{mha_forward_self.4} parent=5 // pred_region
        %s1506 = ssub.s32 %s9, 2
        // Predicated region
        $region172: #{mha_forward_self.4} parent=170 // pred_check
          %p1507 = pneg %p143
        $region173: #{mha_forward_self.4} parent=170 // pred_check_branch
          %1509 = sbr.rel (%p1507) target = $region175
        $region174: #{mha_forward_self.4} parent=170 // pred_region
          %p1510 = scmp.lt.s32.totalorder %s22, 1
          %s1511 = scalar_select %p1510, %s22, 1
          %p1512 = scmp.lt.s32.totalorder %s23, 0
          %s1513 = scalar_select %p1512, %s23, 0
          %s1514 = sadd.s32 %s1513, %s1511
          %s1515 = smul.addr %s1514, 4
          %s1516 = scalar_lea.vmem %s3, %s1515
        $region175: #{mha_forward_self.4} parent=170 // pred_fallthru
          _
      $region171: #{mha_forward_self.4} parent=5 // pred_fallthru
        _
    $region6: #{mha_forward_self.4} parent=1 // loop_footer
      %s13 = sadd.s32 1, %s9
    $region7: #{mha_forward_self.4} parent=1 // loop_footer_branch
      %8 = sbr.rel target = $region3
    $region8: #{mha_forward_self.4} parent=1 // loop_exit
      _

</llo_original>
